<compile_context>
chip_gen: v5e
topology: v5e:2x2
jax: 0.10.0
libtpu: 0.0.40
codegen_flags: <defaults>
</compile_context>

<pallas_src>
import functools
import math

import jax
import jax.numpy as jnp
from jax import lax
from jax.experimental import pallas as pl
from jax.experimental.pallas import tpu as pltpu


def _layer_norm(x, w, b, eps=1e-5):
    # x: (S, C) f32, w/b: (1, C) f32
    mu = jnp.mean(x, axis=-1, keepdims=True)
    var = jnp.mean((x - mu) ** 2, axis=-1, keepdims=True)
    return (x - mu) * lax.rsqrt(var + eps) * w + b


def _erf(x):
    # Abramowitz & Stegun 7.1.26, |err| <= 1.5e-7 (negligible vs bf16 matmul
    # noise).  Only exp/mul/add/where -> guaranteed Mosaic lowering.
    p = 0.3275911
    a1, a2, a3, a4, a5 = (0.254829592, -0.284496736, 1.421413741,
                          -1.453152027, 1.061405429)
    ax = jnp.abs(x)
    t = 1.0 / (1.0 + p * ax)
    poly = ((((a5 * t + a4) * t + a3) * t + a2) * t + a1) * t
    y = 1.0 - poly * jnp.exp(-ax * ax)
    return jnp.where(x < 0.0, -y, y)


def _gelu_exact(x):
    # nn.GELU default = exact erf GELU.
    return 0.5 * x * (1.0 + _erf(x * (1.0 / math.sqrt(2.0))))


def block_kernel(x_ref,
                 ln1_w_ref, ln1_b_ref,
                 wqkv_ref, bqkv_ref,        # (C, 3C) bf16, (1, 3C) f32
                 wop_ref, bop_ref,          # (C, C)  bf16, (1, C)  f32  (Wo@Wp fold)
                 ln2_w_ref, ln2_b_ref,
                 w1_ref, b1_ref,            # (C, H) bf16, (1, H) f32   Mlp.fc1
                 w2_ref, b2_ref,            # (H, C) bf16, (1, C) f32   Mlp.fc2
                 out_ref,
                 attn_scratch,              # (S, C) f32 VMEM scratch
                 *, num_heads):
    bf16 = jnp.bfloat16
    x = x_ref[0]                            # (S, C) f32
    S, C = x.shape
    hd = C // num_heads
    scale = 1.0 / math.sqrt(hd)

    # ---------------- attention branch ----------------
    h = _layer_norm(x, ln1_w_ref[...], ln1_b_ref[...])           # f32

    # Single fused QKV projection: one wide MXU op, slice lanes afterwards.
    qkv = jnp.dot(h.astype(bf16), wqkv_ref[...],
                  preferred_element_type=jnp.float32) + bqkv_ref[...]   # (S, 3C) f32

    # Per-head attention; each head's output goes straight into its lane slice
    # of the VMEM scratch (no concatenate).
    for hh in range(num_heads):              # static unroll over heads
        lo = hh * hd
        qh = (qkv[:, lo:lo + hd] * scale).astype(bf16)
        kh = qkv[:, C + lo:C + lo + hd].astype(bf16)
        vh = qkv[:, 2 * C + lo:2 * C + lo + hd].astype(bf16)

        # q @ k^T without materializing a transpose: contract last dims.
        s = lax.dot_general(qh, kh, (((1,), (1,)), ((), ())),
                            preferred_element_type=jnp.float32)          # (S, S)
        s = s - jnp.max(s, axis=-1, keepdims=True)
        e = jnp.exp(s)
        p = e * pl.reciprocal(jnp.sum(e, axis=-1, keepdims=True), approx=True)
        attn_scratch[:, lo:lo + hd] = jnp.dot(
            p.astype(bf16), vh, preferred_element_type=jnp.float32)

    attn = attn_scratch[...]                                            # (S, C) f32
    # Folded out_proj ∘ proj : single (S,C)@(C,C) matmul.
    attn = jnp.dot(attn.astype(bf16), wop_ref[...],
                   preferred_element_type=jnp.float32) + bop_ref[...]
    x = x + attn

    # ---------------- MLP branch ----------------
    h2 = _layer_norm(x, ln2_w_ref[...], ln2_b_ref[...])
    h2 = jnp.dot(h2.astype(bf16), w1_ref[...],
                 preferred_element_type=jnp.float32) + b1_ref[...]
    h2 = _gelu_exact(h2)
    h2 = jnp.dot(h2.astype(bf16), w2_ref[...],
                 preferred_element_type=jnp.float32) + b2_ref[...]

    out_ref[0] = (x + h2).astype(out_ref.dtype)


def block_forward(x, params, num_heads, *, vmem_limit_bytes=48 * 1024 * 1024):
    (ln1w, ln1b, wqkv, bqkv, wo, bo, wp, bp, ln2w, ln2b, w1, b1, w2, b2) = params
    B, S, C = x.shape
    bf16 = jnp.bfloat16

    # Fold the two back-to-back CxC projections (once, on host, in f32):
    #   (a @ Wo + bo) @ Wp + bp == a @ (Wo @ Wp) + (bo @ Wp + bp)
    w_op = wo @ wp                      # (C, C)
    b_op = bo @ wp + bp                 # (1, C)

    # Weights stored bf16 (halves VMEM/HBM traffic); biases / LN params f32.
    kernel_params = (
        ln1w, ln1b,
        wqkv.astype(bf16), bqkv,
        w_op.astype(bf16), b_op,
        ln2w, ln2b,
        w1.astype(bf16), b1,
        w2.astype(bf16), b2,
    )

    kern = functools.partial(block_kernel, num_heads=num_heads)

    # All kernel params are 2-D and fully resident (block == full array).
    def param_spec(p):
        return pl.BlockSpec(p.shape, lambda b: (0, 0))

    in_specs = [pl.BlockSpec((1, S, C), lambda b: (b, 0, 0))]
    in_specs += [param_spec(p) for p in kernel_params]
    out_specs = pl.BlockSpec((1, S, C), lambda b: (b, 0, 0))

    return pl.pallas_call(
        kern,
        out_shape=jax.ShapeDtypeStruct((B, S, C), x.dtype),
        grid=(B,),
        in_specs=in_specs,
        out_specs=out_specs,
        scratch_shapes=[pltpu.VMEM((S, C), jnp.float32)],
        compiler_params=pltpu.CompilerParams(
            dimension_semantics=("parallel",),
            vmem_limit_bytes=vmem_limit_bytes,
        ),
    )(x, *kernel_params)


# ---------------- pure-JAX f32 reference (semantic truth) ----------------
def reference_forward(x, params, num_heads):
    (ln1w, ln1b, wqkv, bqkv, wo, bo, wp, bp, ln2w, ln2b, w1, b1, w2, b2) = params
    B, S, C = x.shape
    hd = C // num_heads
    scale = 1.0 / math.sqrt(hd)

    def ln(z, w, b):
        mu = z.mean(-1, keepdims=True)
        var = ((z - mu) ** 2).mean(-1, keepdims=True)
        return (z - mu) * lax.rsqrt(var + 1e-5) * w[0] + b[0]

    h = ln(x, ln1w, ln1b)
    qkv = h @ wqkv + bqkv[0]
    q, k, v = qkv[..., :C], qkv[..., C:2 * C], qkv[..., 2 * C:]
    q = q.reshape(B, S, num_heads, hd).transpose(0, 2, 1, 3) * scale
    k = k.reshape(B, S, num_heads, hd).transpose(0, 2, 1, 3)
    v = v.reshape(B, S, num_heads, hd).transpose(0, 2, 1, 3)
    s = q @ jnp.swapaxes(k, -1, -2)
    a = jax.nn.softmax(s, axis=-1)
    o = (a @ v).transpose(0, 2, 1, 3).reshape(B, S, C)
    o = o @ wo + bo[0]
    o = o @ wp + bp[0]
    x = x + o
    h2 = ln(x, ln2w, ln2b)
    h2 = jax.nn.gelu(h2 @ w1 + b1[0], approximate=False)
    h2 = h2 @ w2 + b2[0]
    return x + h2


if __name__ == "__main__":
    B, S, C = 2, 8, 32
    num_heads = 4
    mlp_hidden = int(C * 4.0)

    key = jax.random.PRNGKey(0)
    ks = jax.random.split(key, 20)

    def nrm(k, shape, s=0.05):
        return jax.random.normal(k, shape, dtype=jnp.float32) * s

    # Torch layout is (out, in); pre-transpose to (in, out) so kernel does x @ W.
    ln1_w = 1.0 + nrm(ks[0], (1, C), 0.1)
    ln1_b = nrm(ks[1], (1, C), 0.1)
    w_qkv = nrm(ks[2], (3 * C, C)).T          # (C, 3C)
    b_qkv = nrm(ks[3], (1, 3 * C))
    w_o = nrm(ks[4], (C, C)).T                # MHA out_proj
    b_o = nrm(ks[5], (1, C))
    w_p = nrm(ks[6], (C, C)).T                # Attention.proj
    b_p = nrm(ks[7], (1, C))
    ln2_w = 1.0 + nrm(ks[8], (1, C), 0.1)
    ln2_b = nrm(ks[9], (1, C), 0.1)
    w1 = nrm(ks[10], (mlp_hidden, C)).T       # (C, H)
    b1 = nrm(ks[11], (1, mlp_hidden))
    w2 = nrm(ks[12], (C, mlp_hidden)).T       # (H, C)
    b2 = nrm(ks[13], (1, C))

    params = (ln1_w, ln1_b, w_qkv, b_qkv, w_o, b_o, w_p, b_p,
              ln2_w, ln2_b, w1, b1, w2, b2)

    x = jax.random.normal(ks[14], (B, S, C), dtype=jnp.float32)

    out = block_forward(x, params, num_heads)
    out = jax.block_until_ready(out)

    ref = reference_forward(x, params, num_heads)
    assert out.shape == (B, S, C)
    # bf16 MXU operands + approx reciprocal + Wo@Wp fold => not bit-exact with
    # the all-f32 reference; f32 accumulation keeps the error well inside 2e-2.
    err = jnp.max(jnp.abs(out - ref))
    assert jnp.allclose(out, ref, rtol=2e-2, atol=2e-2), f"mismatch vs reference: {err}"

    print("KERNEL_OK")
</pallas_src>

<mosaic_0001>
module attributes {stable_mosaic.version = 11 : i64} {
  func.func @block_kernel(%arg0: i32, %arg1: memref<1x8x32xf32, #tpu.memory_space<vmem>>, %arg2: memref<1x32xf32, #tpu.memory_space<vmem>>, %arg3: memref<1x32xf32, #tpu.memory_space<vmem>>, %arg4: memref<32x96xbf16, #tpu.memory_space<vmem>>, %arg5: memref<1x96xf32, #tpu.memory_space<vmem>>, %arg6: memref<32x32xbf16, #tpu.memory_space<vmem>>, %arg7: memref<1x32xf32, #tpu.memory_space<vmem>>, %arg8: memref<1x32xf32, #tpu.memory_space<vmem>>, %arg9: memref<1x32xf32, #tpu.memory_space<vmem>>, %arg10: memref<32x128xbf16, #tpu.memory_space<vmem>>, %arg11: memref<1x128xf32, #tpu.memory_space<vmem>>, %arg12: memref<128x32xbf16, #tpu.memory_space<vmem>>, %arg13: memref<1x32xf32, #tpu.memory_space<vmem>>, %arg14: memref<1x8x32xf32, #tpu.memory_space<vmem>>, %arg15: memref<8x32xf32, #tpu.memory_space<vmem>>) attributes {dimension_semantics = [#tpu.dimension_semantics<parallel>], iteration_bounds = array<i64: 2>, scalar_prefetch = 0 : i64, scratch_operands = 1 : i64, tpu.core_type = #tpu.core_type<tc>, window_params = [{transform_indices = @transform_0, window_bounds = array<i64: 1, 8, 32>}, {pipeline_mode = #tpu.pipeline_mode<synchronous>, transform_indices = @transform_1, window_bounds = array<i64: 1, 32>}, {pipeline_mode = #tpu.pipeline_mode<synchronous>, transform_indices = @transform_2, window_bounds = array<i64: 1, 32>}, {pipeline_mode = #tpu.pipeline_mode<synchronous>, transform_indices = @transform_3, window_bounds = array<i64: 32, 96>}, {pipeline_mode = #tpu.pipeline_mode<synchronous>, transform_indices = @transform_4, window_bounds = array<i64: 1, 96>}, {pipeline_mode = #tpu.pipeline_mode<synchronous>, transform_indices = @transform_5, window_bounds = array<i64: 32, 32>}, {pipeline_mode = #tpu.pipeline_mode<synchronous>, transform_indices = @transform_6, window_bounds = array<i64: 1, 32>}, {pipeline_mode = #tpu.pipeline_mode<synchronous>, transform_indices = @transform_7, window_bounds = array<i64: 1, 32>}, {pipeline_mode = #tpu.pipeline_mode<synchronous>, transform_indices = @transform_8, window_bounds = array<i64: 1, 32>}, {pipeline_mode = #tpu.pipeline_mode<synchronous>, transform_indices = @transform_9, window_bounds = array<i64: 32, 128>}, {pipeline_mode = #tpu.pipeline_mode<synchronous>, transform_indices = @transform_10, window_bounds = array<i64: 1, 128>}, {pipeline_mode = #tpu.pipeline_mode<synchronous>, transform_indices = @transform_11, window_bounds = array<i64: 128, 32>}, {pipeline_mode = #tpu.pipeline_mode<synchronous>, transform_indices = @transform_12, window_bounds = array<i64: 1, 32>}, {transform_indices = @transform_13, window_bounds = array<i64: 1, 8, 32>}]} {
    %c0 = arith.constant 0 : index
    %c0_0 = arith.constant 0 : index
    %c0_1 = arith.constant 0 : index
    %0 = vector.load %arg1[%c0, %c0_0, %c0_1] : memref<1x8x32xf32, #tpu.memory_space<vmem>>, vector<1x8x32xf32>
    %1 = vector.shape_cast %0 : vector<1x8x32xf32> to vector<8x32xf32>
    %c0_2 = arith.constant 0 : index
    %c0_3 = arith.constant 0 : index
    %2 = vector.load %arg2[%c0_2, %c0_3] : memref<1x32xf32, #tpu.memory_space<vmem>>, vector<1x32xf32>
    %c0_4 = arith.constant 0 : index
    %c0_5 = arith.constant 0 : index
    %3 = vector.load %arg3[%c0_4, %c0_5] : memref<1x32xf32, #tpu.memory_space<vmem>>, vector<1x32xf32>
    %cst = arith.constant dense<0.000000e+00> : vector<8xf32>
    %4 = vector.multi_reduction <add>, %1, %cst [1] : vector<8x32xf32> to vector<8xf32>
    %5 = vector.shape_cast %4 : vector<8xf32> to vector<8x1xf32>
    %cst_6 = arith.constant 3.200000e+01 : f32
    %6 = vector.broadcast %cst_6 : f32 to vector<8x1xf32>
    %7 = arith.divf %5, %6 : vector<8x1xf32>
    %8 = vector.broadcast %7 : vector<8x1xf32> to vector<8x32xf32>
    %9 = arith.subf %1, %8 : vector<8x32xf32>
    %10 = arith.mulf %9, %9 : vector<8x32xf32>
    %cst_7 = arith.constant dense<0.000000e+00> : vector<8xf32>
    %11 = vector.multi_reduction <add>, %10, %cst_7 [1] : vector<8x32xf32> to vector<8xf32>
    %12 = vector.shape_cast %11 : vector<8xf32> to vector<8x1xf32>
    %cst_8 = arith.constant 3.200000e+01 : f32
    %13 = vector.broadcast %cst_8 : f32 to vector<8x1xf32>
    %14 = arith.divf %12, %13 : vector<8x1xf32>
    %15 = vector.broadcast %7 : vector<8x1xf32> to vector<8x32xf32>
    %16 = arith.subf %1, %15 : vector<8x32xf32>
    %cst_9 = arith.constant 9.99999974E-6 : f32
    %17 = vector.broadcast %cst_9 : f32 to vector<8x1xf32>
    %18 = arith.addf %14, %17 : vector<8x1xf32>
    %19 = math.rsqrt %18 : vector<8x1xf32>
    %20 = vector.broadcast %19 : vector<8x1xf32> to vector<8x32xf32>
    %21 = arith.mulf %16, %20 : vector<8x32xf32>
    %22 = vector.broadcast %2 : vector<1x32xf32> to vector<8x32xf32>
    %23 = arith.mulf %21, %22 : vector<8x32xf32>
    %24 = vector.broadcast %3 : vector<1x32xf32> to vector<8x32xf32>
    %25 = arith.addf %23, %24 : vector<8x32xf32>
    %26 = arith.truncf %25 : vector<8x32xf32> to vector<8x32xbf16>
    %c0_10 = arith.constant 0 : index
    %c0_11 = arith.constant 0 : index
    %27 = vector.load %arg4[%c0_10, %c0_11] : memref<32x96xbf16, #tpu.memory_space<vmem>>, vector<32x96xbf16>
    %cst_12 = arith.constant dense<0.000000e+00> : vector<8x96xf32>
    %28 = tpu.matmul %26, %27, %cst_12 {dimension_numbers = #tpu.dot_dimension_numbers<[1], [0], [0], [1], [0, 0, 1, 1], [], []>} : vector<8x32xbf16>, vector<32x96xbf16>, vector<8x96xf32> -> vector<8x96xf32>
    %c0_13 = arith.constant 0 : index
    %c0_14 = arith.constant 0 : index
    %29 = vector.load %arg5[%c0_13, %c0_14] : memref<1x96xf32, #tpu.memory_space<vmem>>, vector<1x96xf32>
    %30 = vector.broadcast %29 : vector<1x96xf32> to vector<8x96xf32>
    %31 = arith.addf %28, %30 : vector<8x96xf32>
    %32 = vector.extract_strided_slice %31 {offsets = [0, 0], sizes = [8, 8], strides = [1, 1]} : vector<8x96xf32> to vector<8x8xf32>
    %cst_15 = arith.constant 0.353553385 : f32
    %33 = vector.broadcast %cst_15 : f32 to vector<8x8xf32>
    %34 = arith.mulf %32, %33 : vector<8x8xf32>
    %35 = arith.truncf %34 : vector<8x8xf32> to vector<8x8xbf16>
    %36 = vector.extract_strided_slice %31 {offsets = [0, 32], sizes = [8, 8], strides = [1, 1]} : vector<8x96xf32> to vector<8x8xf32>
    %37 = arith.truncf %36 : vector<8x8xf32> to vector<8x8xbf16>
    %38 = vector.extract_strided_slice %31 {offsets = [0, 64], sizes = [8, 8], strides = [1, 1]} : vector<8x96xf32> to vector<8x8xf32>
    %39 = arith.truncf %38 : vector<8x8xf32> to vector<8x8xbf16>
    %cst_16 = arith.constant dense<0.000000e+00> : vector<8x8xf32>
    %40 = tpu.matmul %35, %37, %cst_16 {dimension_numbers = #tpu.dot_dimension_numbers<[1], [1], [0], [0], [0, 0, 1, 0], [], []>} : vector<8x8xbf16>, vector<8x8xbf16>, vector<8x8xf32> -> vector<8x8xf32>
    %cst_17 = arith.constant dense<0xFF800000> : vector<8xf32>
    %41 = vector.multi_reduction <maximumf>, %40, %cst_17 [1] : vector<8x8xf32> to vector<8xf32>
    %42 = vector.shape_cast %41 : vector<8xf32> to vector<8x1xf32>
    %43 = vector.broadcast %42 : vector<8x1xf32> to vector<8x8xf32>
    %44 = arith.subf %40, %43 : vector<8x8xf32>
    %45 = math.exp %44 : vector<8x8xf32>
    %cst_18 = arith.constant dense<0.000000e+00> : vector<8xf32>
    %46 = vector.multi_reduction <add>, %45, %cst_18 [1] : vector<8x8xf32> to vector<8xf32>
    %47 = vector.shape_cast %46 : vector<8xf32> to vector<8x1xf32>
    %48 = tpu.reciprocal %47 {approx = true} : vector<8x1xf32> -> vector<8x1xf32>
    %49 = vector.broadcast %48 : vector<8x1xf32> to vector<8x8xf32>
    %50 = arith.mulf %45, %49 : vector<8x8xf32>
    %51 = arith.truncf %50 : vector<8x8xf32> to vector<8x8xbf16>
    %cst_19 = arith.constant dense<0.000000e+00> : vector<8x8xf32>
    %52 = tpu.matmul %51, %39, %cst_19 {dimension_numbers = #tpu.dot_dimension_numbers<[1], [0], [0], [1], [0, 0, 1, 1], [], []>} : vector<8x8xbf16>, vector<8x8xbf16>, vector<8x8xf32> -> vector<8x8xf32>
    %c0_20 = arith.constant 0 : index
    %c0_21 = arith.constant 0 : index
    %53 = vector.load %arg15[%c0_20, %c0_21] : memref<8x32xf32, #tpu.memory_space<vmem>>, vector<8x8xf32>
    tpu.vector_store %arg15[%c0_20, %c0_21], %52 {strides = array<i32>} : memref<8x32xf32, #tpu.memory_space<vmem>>, vector<8x8xf32>,
    %54 = vector.extract_strided_slice %31 {offsets = [0, 8], sizes = [8, 8], strides = [1, 1]} : vector<8x96xf32> to vector<8x8xf32>
    %cst_22 = arith.constant 0.353553385 : f32
    %55 = vector.broadcast %cst_22 : f32 to vector<8x8xf32>
    %56 = arith.mulf %54, %55 : vector<8x8xf32>
    %57 = arith.truncf %56 : vector<8x8xf32> to vector<8x8xbf16>
    %58 = vector.extract_strided_slice %31 {offsets = [0, 40], sizes = [8, 8], strides = [1, 1]} : vector<8x96xf32> to vector<8x8xf32>
    %59 = arith.truncf %58 : vector<8x8xf32> to vector<8x8xbf16>
    %60 = vector.extract_strided_slice %31 {offsets = [0, 72], sizes = [8, 8], strides = [1, 1]} : vector<8x96xf32> to vector<8x8xf32>
    %61 = arith.truncf %60 : vector<8x8xf32> to vector<8x8xbf16>
    %cst_23 = arith.constant dense<0.000000e+00> : vector<8x8xf32>
    %62 = tpu.matmul %57, %59, %cst_23 {dimension_numbers = #tpu.dot_dimension_numbers<[1], [1], [0], [0], [0, 0, 1, 0], [], []>} : vector<8x8xbf16>, vector<8x8xbf16>, vector<8x8xf32> -> vector<8x8xf32>
    %cst_24 = arith.constant dense<0xFF800000> : vector<8xf32>
    %63 = vector.multi_reduction <maximumf>, %62, %cst_24 [1] : vector<8x8xf32> to vector<8xf32>
    %64 = vector.shape_cast %63 : vector<8xf32> to vector<8x1xf32>
    %65 = vector.broadcast %64 : vector<8x1xf32> to vector<8x8xf32>
    %66 = arith.subf %62, %65 : vector<8x8xf32>
    %67 = math.exp %66 : vector<8x8xf32>
    %cst_25 = arith.constant dense<0.000000e+00> : vector<8xf32>
    %68 = vector.multi_reduction <add>, %67, %cst_25 [1] : vector<8x8xf32> to vector<8xf32>
    %69 = vector.shape_cast %68 : vector<8xf32> to vector<8x1xf32>
    %70 = tpu.reciprocal %69 {approx = true} : vector<8x1xf32> -> vector<8x1xf32>
    %71 = vector.broadcast %70 : vector<8x1xf32> to vector<8x8xf32>
    %72 = arith.mulf %67, %71 : vector<8x8xf32>
    %73 = arith.truncf %72 : vector<8x8xf32> to vector<8x8xbf16>
    %cst_26 = arith.constant dense<0.000000e+00> : vector<8x8xf32>
    %74 = tpu.matmul %73, %61, %cst_26 {dimension_numbers = #tpu.dot_dimension_numbers<[1], [0], [0], [1], [0, 0, 1, 1], [], []>} : vector<8x8xbf16>, vector<8x8xbf16>, vector<8x8xf32> -> vector<8x8xf32>
    %c0_27 = arith.constant 0 : index
    %c8 = arith.constant 8 : index
    %75 = vector.load %arg15[%c0_27, %c8] : memref<8x32xf32, #tpu.memory_space<vmem>>, vector<8x8xf32>
    tpu.vector_store %arg15[%c0_27, %c8], %74 {strides = array<i32>} : memref<8x32xf32, #tpu.memory_space<vmem>>, vector<8x8xf32>,
    %76 = vector.extract_strided_slice %31 {offsets = [0, 16], sizes = [8, 8], strides = [1, 1]} : vector<8x96xf32> to vector<8x8xf32>
    %cst_28 = arith.constant 0.353553385 : f32
    %77 = vector.broadcast %cst_28 : f32 to vector<8x8xf32>
    %78 = arith.mulf %76, %77 : vector<8x8xf32>
    %79 = arith.truncf %78 : vector<8x8xf32> to vector<8x8xbf16>
    %80 = vector.extract_strided_slice %31 {offsets = [0, 48], sizes = [8, 8], strides = [1, 1]} : vector<8x96xf32> to vector<8x8xf32>
    %81 = arith.truncf %80 : vector<8x8xf32> to vector<8x8xbf16>
    %82 = vector.extract_strided_slice %31 {offsets = [0, 80], sizes = [8, 8], strides = [1, 1]} : vector<8x96xf32> to vector<8x8xf32>
    %83 = arith.truncf %82 : vector<8x8xf32> to vector<8x8xbf16>
    %cst_29 = arith.constant dense<0.000000e+00> : vector<8x8xf32>
    %84 = tpu.matmul %79, %81, %cst_29 {dimension_numbers = #tpu.dot_dimension_numbers<[1], [1], [0], [0], [0, 0, 1, 0], [], []>} : vector<8x8xbf16>, vector<8x8xbf16>, vector<8x8xf32> -> vector<8x8xf32>
    %cst_30 = arith.constant dense<0xFF800000> : vector<8xf32>
    %85 = vector.multi_reduction <maximumf>, %84, %cst_30 [1] : vector<8x8xf32> to vector<8xf32>
    %86 = vector.shape_cast %85 : vector<8xf32> to vector<8x1xf32>
    %87 = vector.broadcast %86 : vector<8x1xf32> to vector<8x8xf32>
    %88 = arith.subf %84, %87 : vector<8x8xf32>
    %89 = math.exp %88 : vector<8x8xf32>
    %cst_31 = arith.constant dense<0.000000e+00> : vector<8xf32>
    %90 = vector.multi_reduction <add>, %89, %cst_31 [1] : vector<8x8xf32> to vector<8xf32>
    %91 = vector.shape_cast %90 : vector<8xf32> to vector<8x1xf32>
    %92 = tpu.reciprocal %91 {approx = true} : vector<8x1xf32> -> vector<8x1xf32>
    %93 = vector.broadcast %92 : vector<8x1xf32> to vector<8x8xf32>
    %94 = arith.mulf %89, %93 : vector<8x8xf32>
    %95 = arith.truncf %94 : vector<8x8xf32> to vector<8x8xbf16>
    %cst_32 = arith.constant dense<0.000000e+00> : vector<8x8xf32>
    %96 = tpu.matmul %95, %83, %cst_32 {dimension_numbers = #tpu.dot_dimension_numbers<[1], [0], [0], [1], [0, 0, 1, 1], [], []>} : vector<8x8xbf16>, vector<8x8xbf16>, vector<8x8xf32> -> vector<8x8xf32>
    %c0_33 = arith.constant 0 : index
    %c16 = arith.constant 16 : index
    %97 = vector.load %arg15[%c0_33, %c16] : memref<8x32xf32, #tpu.memory_space<vmem>>, vector<8x8xf32>
    tpu.vector_store %arg15[%c0_33, %c16], %96 {strides = array<i32>} : memref<8x32xf32, #tpu.memory_space<vmem>>, vector<8x8xf32>,
    %98 = vector.extract_strided_slice %31 {offsets = [0, 24], sizes = [8, 8], strides = [1, 1]} : vector<8x96xf32> to vector<8x8xf32>
    %cst_34 = arith.constant 0.353553385 : f32
    %99 = vector.broadcast %cst_34 : f32 to vector<8x8xf32>
    %100 = arith.mulf %98, %99 : vector<8x8xf32>
    %101 = arith.truncf %100 : vector<8x8xf32> to vector<8x8xbf16>
    %102 = vector.extract_strided_slice %31 {offsets = [0, 56], sizes = [8, 8], strides = [1, 1]} : vector<8x96xf32> to vector<8x8xf32>
    %103 = arith.truncf %102 : vector<8x8xf32> to vector<8x8xbf16>
    %104 = vector.extract_strided_slice %31 {offsets = [0, 88], sizes = [8, 8], strides = [1, 1]} : vector<8x96xf32> to vector<8x8xf32>
    %105 = arith.truncf %104 : vector<8x8xf32> to vector<8x8xbf16>
    %cst_35 = arith.constant dense<0.000000e+00> : vector<8x8xf32>
    %106 = tpu.matmul %101, %103, %cst_35 {dimension_numbers = #tpu.dot_dimension_numbers<[1], [1], [0], [0], [0, 0, 1, 0], [], []>} : vector<8x8xbf16>, vector<8x8xbf16>, vector<8x8xf32> -> vector<8x8xf32>
    %cst_36 = arith.constant dense<0xFF800000> : vector<8xf32>
    %107 = vector.multi_reduction <maximumf>, %106, %cst_36 [1] : vector<8x8xf32> to vector<8xf32>
    %108 = vector.shape_cast %107 : vector<8xf32> to vector<8x1xf32>
    %109 = vector.broadcast %108 : vector<8x1xf32> to vector<8x8xf32>
    %110 = arith.subf %106, %109 : vector<8x8xf32>
    %111 = math.exp %110 : vector<8x8xf32>
    %cst_37 = arith.constant dense<0.000000e+00> : vector<8xf32>
    %112 = vector.multi_reduction <add>, %111, %cst_37 [1] : vector<8x8xf32> to vector<8xf32>
    %113 = vector.shape_cast %112 : vector<8xf32> to vector<8x1xf32>
    %114 = tpu.reciprocal %113 {approx = true} : vector<8x1xf32> -> vector<8x1xf32>
    %115 = vector.broadcast %114 : vector<8x1xf32> to vector<8x8xf32>
    %116 = arith.mulf %111, %115 : vector<8x8xf32>
    %117 = arith.truncf %116 : vector<8x8xf32> to vector<8x8xbf16>
    %cst_38 = arith.constant dense<0.000000e+00> : vector<8x8xf32>
    %118 = tpu.matmul %117, %105, %cst_38 {dimension_numbers = #tpu.dot_dimension_numbers<[1], [0], [0], [1], [0, 0, 1, 1], [], []>} : vector<8x8xbf16>, vector<8x8xbf16>, vector<8x8xf32> -> vector<8x8xf32>
    %c0_39 = arith.constant 0 : index
    %c24 = arith.constant 24 : index
    %119 = vector.load %arg15[%c0_39, %c24] : memref<8x32xf32, #tpu.memory_space<vmem>>, vector<8x8xf32>
    tpu.vector_store %arg15[%c0_39, %c24], %118 {strides = array<i32>} : memref<8x32xf32, #tpu.memory_space<vmem>>, vector<8x8xf32>,
    %c0_40 = arith.constant 0 : index
    %c0_41 = arith.constant 0 : index
    %120 = vector.load %arg15[%c0_40, %c0_41] : memref<8x32xf32, #tpu.memory_space<vmem>>, vector<8x32xf32>
    %121 = arith.truncf %120 : vector<8x32xf32> to vector<8x32xbf16>
    %c0_42 = arith.constant 0 : index
    %c0_43 = arith.constant 0 : index
    %122 = vector.load %arg6[%c0_42, %c0_43] : memref<32x32xbf16, #tpu.memory_space<vmem>>, vector<32x32xbf16>
    %cst_44 = arith.constant dense<0.000000e+00> : vector<8x32xf32>
    %123 = tpu.matmul %121, %122, %cst_44 {dimension_numbers = #tpu.dot_dimension_numbers<[1], [0], [0], [1], [0, 0, 1, 1], [], []>} : vector<8x32xbf16>, vector<32x32xbf16>, vector<8x32xf32> -> vector<8x32xf32>
    %c0_45 = arith.constant 0 : index
    %c0_46 = arith.constant 0 : index
    %124 = vector.load %arg7[%c0_45, %c0_46] : memref<1x32xf32, #tpu.memory_space<vmem>>, vector<1x32xf32>
    %125 = vector.broadcast %124 : vector<1x32xf32> to vector<8x32xf32>
    %126 = arith.addf %123, %125 : vector<8x32xf32>
    %127 = arith.addf %1, %126 : vector<8x32xf32>
    %c0_47 = arith.constant 0 : index
    %c0_48 = arith.constant 0 : index
    %128 = vector.load %arg8[%c0_47, %c0_48] : memref<1x32xf32, #tpu.memory_space<vmem>>, vector<1x32xf32>
    %c0_49 = arith.constant 0 : index
    %c0_50 = arith.constant 0 : index
    %129 = vector.load %arg9[%c0_49, %c0_50] : memref<1x32xf32, #tpu.memory_space<vmem>>, vector<1x32xf32>
    %cst_51 = arith.constant dense<0.000000e+00> : vector<8xf32>
    %130 = vector.multi_reduction <add>, %127, %cst_51 [1] : vector<8x32xf32> to vector<8xf32>
    %131 = vector.shape_cast %130 : vector<8xf32> to vector<8x1xf32>
    %cst_52 = arith.constant 3.200000e+01 : f32
    %132 = vector.broadcast %cst_52 : f32 to vector<8x1xf32>
    %133 = arith.divf %131, %132 : vector<8x1xf32>
    %134 = vector.broadcast %133 : vector<8x1xf32> to vector<8x32xf32>
    %135 = arith.subf %127, %134 : vector<8x32xf32>
    %136 = arith.mulf %135, %135 : vector<8x32xf32>
    %cst_53 = arith.constant dense<0.000000e+00> : vector<8xf32>
    %137 = vector.multi_reduction <add>, %136, %cst_53 [1] : vector<8x32xf32> to vector<8xf32>
    %138 = vector.shape_cast %137 : vector<8xf32> to vector<8x1xf32>
    %cst_54 = arith.constant 3.200000e+01 : f32
    %139 = vector.broadcast %cst_54 : f32 to vector<8x1xf32>
    %140 = arith.divf %138, %139 : vector<8x1xf32>
    %141 = vector.broadcast %133 : vector<8x1xf32> to vector<8x32xf32>
    %142 = arith.subf %127, %141 : vector<8x32xf32>
    %cst_55 = arith.constant 9.99999974E-6 : f32
    %143 = vector.broadcast %cst_55 : f32 to vector<8x1xf32>
    %144 = arith.addf %140, %143 : vector<8x1xf32>
    %145 = math.rsqrt %144 : vector<8x1xf32>
    %146 = vector.broadcast %145 : vector<8x1xf32> to vector<8x32xf32>
    %147 = arith.mulf %142, %146 : vector<8x32xf32>
    %148 = vector.broadcast %128 : vector<1x32xf32> to vector<8x32xf32>
    %149 = arith.mulf %147, %148 : vector<8x32xf32>
    %150 = vector.broadcast %129 : vector<1x32xf32> to vector<8x32xf32>
    %151 = arith.addf %149, %150 : vector<8x32xf32>
    %152 = arith.truncf %151 : vector<8x32xf32> to vector<8x32xbf16>
    %c0_56 = arith.constant 0 : index
    %c0_57 = arith.constant 0 : index
    %153 = vector.load %arg10[%c0_56, %c0_57] : memref<32x128xbf16, #tpu.memory_space<vmem>>, vector<32x128xbf16>
    %cst_58 = arith.constant dense<0.000000e+00> : vector<8x128xf32>
    %154 = tpu.matmul %152, %153, %cst_58 {dimension_numbers = #tpu.dot_dimension_numbers<[1], [0], [0], [1], [0, 0, 1, 1], [], []>} : vector<8x32xbf16>, vector<32x128xbf16>, vector<8x128xf32> -> vector<8x128xf32>
    %c0_59 = arith.constant 0 : index
    %c0_60 = arith.constant 0 : index
    %155 = vector.load %arg11[%c0_59, %c0_60] : memref<1x128xf32, #tpu.memory_space<vmem>>, vector<1x128xf32>
    %156 = vector.broadcast %155 : vector<1x128xf32> to vector<8x128xf32>
    %157 = arith.addf %154, %156 : vector<8x128xf32>
    %cst_61 = arith.constant 5.000000e-01 : f32
    %158 = vector.broadcast %cst_61 : f32 to vector<8x128xf32>
    %159 = arith.mulf %158, %157 : vector<8x128xf32>
    %cst_62 = arith.constant 0.707106769 : f32
    %160 = vector.broadcast %cst_62 : f32 to vector<8x128xf32>
    %161 = arith.mulf %157, %160 : vector<8x128xf32>
    %162 = math.absf %161 : vector<8x128xf32>
    %cst_63 = arith.constant 0.327591091 : f32
    %163 = vector.broadcast %cst_63 : f32 to vector<8x128xf32>
    %164 = arith.mulf %163, %162 : vector<8x128xf32>
    %cst_64 = arith.constant 1.000000e+00 : f32
    %165 = vector.broadcast %cst_64 : f32 to vector<8x128xf32>
    %166 = arith.addf %165, %164 : vector<8x128xf32>
    %cst_65 = arith.constant 1.000000e+00 : f32
    %167 = vector.broadcast %cst_65 : f32 to vector<8x128xf32>
    %168 = arith.divf %167, %166 : vector<8x128xf32>
    %cst_66 = arith.constant 1.06140542 : f32
    %169 = vector.broadcast %cst_66 : f32 to vector<8x128xf32>
    %170 = arith.mulf %169, %168 : vector<8x128xf32>
    %cst_67 = arith.constant -1.45315206 : f32
    %171 = vector.broadcast %cst_67 : f32 to vector<8x128xf32>
    %172 = arith.addf %170, %171 : vector<8x128xf32>
    %173 = arith.mulf %172, %168 : vector<8x128xf32>
    %cst_68 = arith.constant 1.42141378 : f32
    %174 = vector.broadcast %cst_68 : f32 to vector<8x128xf32>
    %175 = arith.addf %173, %174 : vector<8x128xf32>
    %176 = arith.mulf %175, %168 : vector<8x128xf32>
    %cst_69 = arith.constant -0.284496725 : f32
    %177 = vector.broadcast %cst_69 : f32 to vector<8x128xf32>
    %178 = arith.addf %176, %177 : vector<8x128xf32>
    %179 = arith.mulf %178, %168 : vector<8x128xf32>
    %cst_70 = arith.constant 0.254829586 : f32
    %180 = vector.broadcast %cst_70 : f32 to vector<8x128xf32>
    %181 = arith.addf %179, %180 : vector<8x128xf32>
    %182 = arith.mulf %181, %168 : vector<8x128xf32>
    %cst_71 = arith.constant 0.000000e+00 : f32
    %183 = vector.broadcast %cst_71 : f32 to vector<8x128xf32>
    %184 = arith.subf %183, %162 : vector<8x128xf32>
    %185 = arith.mulf %184, %162 : vector<8x128xf32>
    %186 = math.exp %185 : vector<8x128xf32>
    %187 = arith.mulf %182, %186 : vector<8x128xf32>
    %cst_72 = arith.constant 1.000000e+00 : f32
    %188 = vector.broadcast %cst_72 : f32 to vector<8x128xf32>
    %189 = arith.subf %188, %187 : vector<8x128xf32>
    %cst_73 = arith.constant 0.000000e+00 : f32
    %190 = vector.broadcast %cst_73 : f32 to vector<8x128xf32>
    %191 = arith.cmpf olt, %161, %190 : vector<8x128xf32>
    %cst_74 = arith.constant 0.000000e+00 : f32
    %192 = vector.broadcast %cst_74 : f32 to vector<8x128xf32>
    %193 = arith.subf %192, %189 : vector<8x128xf32>
    %194 = arith.select %191, %193, %189 : vector<8x128xi1>, vector<8x128xf32>
    %cst_75 = arith.constant 1.000000e+00 : f32
    %195 = vector.broadcast %cst_75 : f32 to vector<8x128xf32>
    %196 = arith.addf %195, %194 : vector<8x128xf32>
    %197 = arith.mulf %159, %196 : vector<8x128xf32>
    %198 = arith.truncf %197 : vector<8x128xf32> to vector<8x128xbf16>
    %c0_76 = arith.constant 0 : index
    %c0_77 = arith.constant 0 : index
    %199 = vector.load %arg12[%c0_76, %c0_77] : memref<128x32xbf16, #tpu.memory_space<vmem>>, vector<128x32xbf16>
    %cst_78 = arith.constant dense<0.000000e+00> : vector<8x32xf32>
    %200 = tpu.matmul %198, %199, %cst_78 {dimension_numbers = #tpu.dot_dimension_numbers<[1], [0], [0], [1], [0, 0, 1, 1], [], []>} : vector<8x128xbf16>, vector<128x32xbf16>, vector<8x32xf32> -> vector<8x32xf32>
    %c0_79 = arith.constant 0 : index
    %c0_80 = arith.constant 0 : index
    %201 = vector.load %arg13[%c0_79, %c0_80] : memref<1x32xf32, #tpu.memory_space<vmem>>, vector<1x32xf32>
    %202 = vector.broadcast %201 : vector<1x32xf32> to vector<8x32xf32>
    %203 = arith.addf %200, %202 : vector<8x32xf32>
    %204 = arith.addf %127, %203 : vector<8x32xf32>
    %c0_81 = arith.constant 0 : index
    %c0_82 = arith.constant 0 : index
    %c0_83 = arith.constant 0 : index
    %205 = vector.load %arg14[%c0_81, %c0_82, %c0_83] : memref<1x8x32xf32, #tpu.memory_space<vmem>>, vector<1x8x32xf32>
    %206 = vector.shape_cast %205 : vector<1x8x32xf32> to vector<8x32xf32>
    %207 = vector.shape_cast %204 : vector<8x32xf32> to vector<1x8x32xf32>
    tpu.vector_store %arg14[%c0_81, %c0_82, %c0_83], %207 {strides = array<i32>} : memref<1x8x32xf32, #tpu.memory_space<vmem>>, vector<1x8x32xf32>,
    return
  }
  func.func @transform_0(%arg0: i32) -> (i32, i32, i32) {
    %c0_i32 = arith.constant 0 : i32
    %c0_i32_0 = arith.constant 0 : i32
    %c0_i32_1 = arith.constant 0 : i32
    return %arg0, %c0_i32, %c0_i32_0 : i32, i32, i32
  }
  func.func @transform_1(%arg0: i32) -> (i32, i32) {
    %c0_i32 = arith.constant 0 : i32
    %c0_i32_0 = arith.constant 0 : i32
    %c0_i32_1 = arith.constant 0 : i32
    return %c0_i32, %c0_i32_0 : i32, i32
  }
  func.func @transform_2(%arg0: i32) -> (i32, i32) {
    %c0_i32 = arith.constant 0 : i32
    %c0_i32_0 = arith.constant 0 : i32
    %c0_i32_1 = arith.constant 0 : i32
    return %c0_i32, %c0_i32_0 : i32, i32
  }
  func.func @transform_3(%arg0: i32) -> (i32, i32) {
    %c0_i32 = arith.constant 0 : i32
    %c0_i32_0 = arith.constant 0 : i32
    %c0_i32_1 = arith.constant 0 : i32
    return %c0_i32, %c0_i32_0 : i32, i32
  }
  func.func @transform_4(%arg0: i32) -> (i32, i32) {
    %c0_i32 = arith.constant 0 : i32
    %c0_i32_0 = arith.constant 0 : i32
    %c0_i32_1 = arith.constant 0 : i32
    return %c0_i32, %c0_i32_0 : i32, i32
  }
  func.func @transform_5(%arg0: i32) -> (i32, i32) {
    %c0_i32 = arith.constant 0 : i32
    %c0_i32_0 = arith.constant 0 : i32
    %c0_i32_1 = arith.constant 0 : i32
    return %c0_i32, %c0_i32_0 : i32, i32
  }
  func.func @transform_6(%arg0: i32) -> (i32, i32) {
    %c0_i32 = arith.constant 0 : i32
    %c0_i32_0 = arith.constant 0 : i32
    %c0_i32_1 = arith.constant 0 : i32
    return %c0_i32, %c0_i32_0 : i32, i32
  }
  func.func @transform_7(%arg0: i32) -> (i32, i32) {
    %c0_i32 = arith.constant 0 : i32
    %c0_i32_0 = arith.constant 0 : i32
    %c0_i32_1 = arith.constant 0 : i32
    return %c0_i32, %c0_i32_0 : i32, i32
  }
  func.func @transform_8(%arg0: i32) -> (i32, i32) {
    %c0_i32 = arith.constant 0 : i32
    %c0_i32_0 = arith.constant 0 : i32
    %c0_i32_1 = arith.constant 0 : i32
    return %c0_i32, %c0_i32_0 : i32, i32
  }
  func.func @transform_9(%arg0: i32) -> (i32, i32) {
    %c0_i32 = arith.constant 0 : i32
    %c0_i32_0 = arith.constant 0 : i32
    %c0_i32_1 = arith.constant 0 : i32
    return %c0_i32, %c0_i32_0 : i32, i32
  }
  func.func @transform_10(%arg0: i32) -> (i32, i32) {
    %c0_i32 = arith.constant 0 : i32
    %c0_i32_0 = arith.constant 0 : i32
    %c0_i32_1 = arith.constant 0 : i32
    return %c0_i32, %c0_i32_0 : i32, i32
  }
  func.func @transform_11(%arg0: i32) -> (i32, i32) {
    %c0_i32 = arith.constant 0 : i32
    %c0_i32_0 = arith.constant 0 : i32
    %c0_i32_1 = arith.constant 0 : i32
    return %c0_i32, %c0_i32_0 : i32, i32
  }
  func.func @transform_12(%arg0: i32) -> (i32, i32) {
    %c0_i32 = arith.constant 0 : i32
    %c0_i32_0 = arith.constant 0 : i32
    %c0_i32_1 = arith.constant 0 : i32
    return %c0_i32, %c0_i32_0 : i32, i32
  }
  func.func @transform_13(%arg0: i32) -> (i32, i32, i32) {
    %c0_i32 = arith.constant 0 : i32
    %c0_i32_0 = arith.constant 0 : i32
    %c0_i32_1 = arith.constant 0 : i32
    return %arg0, %c0_i32, %c0_i32_0 : i32, i32, i32
  }
}

</mosaic_0001>

<llo_original>
// kernel: tpu_custom_call.1
$region0: #{tpu_custom_call.1}
  #allocation0 [shape = 'u32[]', space=smem, size = 0x4, offset = 0x4, fixed_abs, tag = 'smem constant byte address 0x4 - core index']
  #allocation1 [shape = 'u32[72,128]{1,0:T(1,128)}', space=vmem, size = 0x9000, scoped, tag = 'internal scratch']
  #allocation2 [shape = 'f32[8,32]{1,0:T(8,128)}', space=vmem, size = 0x1000, scoped, tag = 'scratch operand']
  %s0 = inlined_call_operand.vmem [shape: f32[2,8,32], index: 0, kind: input, shape index: {}]
  %s1 = inlined_call_operand.vmem [shape: f32[1,32], index: 1, kind: input, shape index: {}]
  %s2 = inlined_call_operand.vmem [shape: f32[1,32], index: 2, kind: input, shape index: {}]
  %s3 = inlined_call_operand.vmem [shape: bf16[32,96], index: 3, kind: input, shape index: {}]
  %s4 = inlined_call_operand.vmem [shape: f32[1,96], index: 4, kind: input, shape index: {}]
  %s5 = inlined_call_operand.vmem [shape: bf16[32,32], index: 5, kind: input, shape index: {}]
  %s6 = inlined_call_operand.vmem [shape: f32[1,32], index: 6, kind: input, shape index: {}]
  %s7 = inlined_call_operand.vmem [shape: f32[1,32], index: 7, kind: input, shape index: {}]
  %s8 = inlined_call_operand.vmem [shape: f32[1,32], index: 8, kind: input, shape index: {}]
  %s9 = inlined_call_operand.vmem [shape: bf16[32,128], index: 9, kind: input, shape index: {}]
  %s10 = inlined_call_operand.vmem [shape: f32[1,128], index: 10, kind: input, shape index: {}]
  %s11 = inlined_call_operand.vmem [shape: bf16[128,32], index: 11, kind: input, shape index: {}]
  %s12 = inlined_call_operand.vmem [shape: f32[1,32], index: 12, kind: input, shape index: {}]
  %s13 = inlined_call_operand.hbm [shape: f32[2,8,32], index: 13, kind: output, shape index: {}]
  %s14 = sld [smem:[#allocation0]]
  $region85: #{tpu_custom_call.1} parent=0
    _
  %s16 = ssub.s32 1, %s14
  %s17 = scalar_select 0, %s16, %s14
  $region1: #{tpu_custom_call.1} parent=0
    #allocation3 [shape = 'u8[8192]{0}', space=vmem, size = 0x2000, scoped, tag = 'output window, operand 0']
    #allocation4 [shape = 's32[2]{0}', space=sflag, size = 0x8, scoped, tag = 'scoped memory for tpu_custom_call.1']
    %18 = vsyncpa [#allocation4], 0
    %s19 = scalar_lea.sflag [#allocation4], 1
    %20 = vsyncpa %s19, 0
    loop: start=0, step=1, limit=4
    $region2: #{tpu_custom_call.1} parent=1 // loop_pre_header
      _
    $region3: #{tpu_custom_call.1} parent=1 // loop_header
      %s22 = sphi 0, %s26
      %p23 = scmp.ge.s32.totalorder %s22, 4
      %s32 = sphi 0, %s34
      %s35 = sphi 0, %s32
      %s36 = sphi 0, %s35
      %s52 = sphi 0, %s36
      %s56 = sphi 0, %s56
      %s58 = sphi 0, %s56
      %s59 = sphi 0, %s58
      %s73 = sphi 0, %s59
      %s77 = sphi 0, %s77
      %s79 = sphi 0, %s77
      %s80 = sphi 0, %s79
      %s94 = sphi 0, %s80
      %s98 = sphi 0, %s98
      %s100 = sphi 0, %s98
      %s101 = sphi 0, %s100
      %s115 = sphi 0, %s101
      %s119 = sphi 0, %s119
      %s121 = sphi 0, %s119
      %s122 = sphi 0, %s121
      %s136 = sphi 0, %s122
      %s140 = sphi 0, %s140
      %s142 = sphi 0, %s140
      %s143 = sphi 0, %s142
      %s157 = sphi 0, %s143
      %s161 = sphi 0, %s161
      %s163 = sphi 0, %s161
      %s164 = sphi 0, %s163
      %s178 = sphi 0, %s164
      %s182 = sphi 0, %s182
      %s184 = sphi 0, %s182
      %s185 = sphi 0, %s184
      %s199 = sphi 0, %s185
      %s203 = sphi 0, %s203
      %s205 = sphi 0, %s203
      %s206 = sphi 0, %s205
      %s220 = sphi 0, %s206
      %s224 = sphi 0, %s224
      %s226 = sphi 0, %s224
      %s227 = sphi 0, %s226
      %s241 = sphi 0, %s227
      %s245 = sphi 0, %s245
      %s247 = sphi 0, %s245
      %s248 = sphi 0, %s247
      %s262 = sphi 0, %s248
      %s266 = sphi 0, %s266
      %s268 = sphi 0, %s266
      %s269 = sphi 0, %s268
      %s283 = sphi 0, %s269
      %s287 = sphi 0, %s287
      %s289 = sphi 0, %s287
      %s290 = sphi 0, %s289
      %s304 = sphi 0, %s290
      %s310 = sphi 0, %s312
      %s313 = sphi 0, %s310
      %s314 = sphi 0, %s313
      %s330 = sphi 0, %s314
    $region4: #{tpu_custom_call.1} parent=1 // loop_header_branch
      %25 = sbr.rel (%p23) target = $region8
    $region5: #{tpu_custom_call.1} parent=1 // loop_body
      %s27 = ssub.s32 %s22, 1
      %s28 = ssub.s32 %s22, 2
      %s29 = sadd.s32 %s22, 1
      %s30 = ssub.s32 %s22, %s29
      %p31 = scmp.eq.s32.totalorder %s30, 0
      %s33 = sadd.s32 %s32, 1
      %s34 = scalar_select %p31, %s32, %s33
      %p37 = pneg %p31
      %p38 = scmp.eq.s32.totalorder %s22, 1
      %p39 = por %p37, %p38
      %p40 = scmp.ne.s32.totalorder %s32, %s35
      %p41 = scmp.eq.s32.totalorder %s22, 0
      %p42 = por %p40, %p41
      %p43 = scmp.ne.s32.totalorder %s32, %s35
      %p44 = scmp.eq.s32.totalorder %s27, 1
      %p45 = por %p43, %p44
      %p46 = scmp.ne.s32.totalorder %s35, %s36
      %p47 = scmp.eq.s32.totalorder %s27, 0
      %p48 = por %p46, %p47
      %p49 = scmp.ne.s32.totalorder %s35, %s36
      %p50 = scmp.eq.s32.totalorder %s28, 1
      %p51 = por %p49, %p50
      %p53 = scmp.ne.s32.totalorder %s36, %s52
      %p54 = scmp.eq.s32.totalorder %s28, 0
      %p55 = por %p53, %p54
      %s57 = sadd.s32 %s56, 1
      %p60 = scmp.eq.s32.totalorder %s22, 1
      %p61 = scmp.ne.s32.totalorder %s56, %s58
      %p62 = scmp.eq.s32.totalorder %s22, 0
      %p63 = por %p61, %p62
      %p64 = scmp.ne.s32.totalorder %s56, %s58
      %p65 = scmp.eq.s32.totalorder %s27, 1
      %p66 = por %p64, %p65
      %p67 = scmp.ne.s32.totalorder %s58, %s59
      %p68 = scmp.eq.s32.totalorder %s27, 0
      %p69 = por %p67, %p68
      %p70 = scmp.ne.s32.totalorder %s58, %s59
      %p71 = scmp.eq.s32.totalorder %s28, 1
      %p72 = por %p70, %p71
      %p74 = scmp.ne.s32.totalorder %s59, %s73
      %p75 = scmp.eq.s32.totalorder %s28, 0
      %p76 = por %p74, %p75
      %s78 = sadd.s32 %s77, 1
      %p81 = scmp.eq.s32.totalorder %s22, 1
      %p82 = scmp.ne.s32.totalorder %s77, %s79
      %p83 = scmp.eq.s32.totalorder %s22, 0
      %p84 = por %p82, %p83
      %p85 = scmp.ne.s32.totalorder %s77, %s79
      %p86 = scmp.eq.s32.totalorder %s27, 1
      %p87 = por %p85, %p86
      %p88 = scmp.ne.s32.totalorder %s79, %s80
      %p89 = scmp.eq.s32.totalorder %s27, 0
      %p90 = por %p88, %p89
      %p91 = scmp.ne.s32.totalorder %s79, %s80
      %p92 = scmp.eq.s32.totalorder %s28, 1
      %p93 = por %p91, %p92
      %p95 = scmp.ne.s32.totalorder %s80, %s94
      %p96 = scmp.eq.s32.totalorder %s28, 0
      %p97 = por %p95, %p96
      %s99 = sadd.s32 %s98, 1
      %p102 = scmp.eq.s32.totalorder %s22, 1
      %p103 = scmp.ne.s32.totalorder %s98, %s100
      %p104 = scmp.eq.s32.totalorder %s22, 0
      %p105 = por %p103, %p104
      %p106 = scmp.ne.s32.totalorder %s98, %s100
      %p107 = scmp.eq.s32.totalorder %s27, 1
      %p108 = por %p106, %p107
      %p109 = scmp.ne.s32.totalorder %s100, %s101
      %p110 = scmp.eq.s32.totalorder %s27, 0
      %p111 = por %p109, %p110
      %p112 = scmp.ne.s32.totalorder %s100, %s101
      %p113 = scmp.eq.s32.totalorder %s28, 1
      %p114 = por %p112, %p113
      %p116 = scmp.ne.s32.totalorder %s101, %s115
      %p117 = scmp.eq.s32.totalorder %s28, 0
      %p118 = por %p116, %p117
      %s120 = sadd.s32 %s119, 1
      %p123 = scmp.eq.s32.totalorder %s22, 1
      %p124 = scmp.ne.s32.totalorder %s119, %s121
      %p125 = scmp.eq.s32.totalorder %s22, 0
      %p126 = por %p124, %p125
      %p127 = scmp.ne.s32.totalorder %s119, %s121
      %p128 = scmp.eq.s32.totalorder %s27, 1
      %p129 = por %p127, %p128
      %p130 = scmp.ne.s32.totalorder %s121, %s122
      %p131 = scmp.eq.s32.totalorder %s27, 0
      %p132 = por %p130, %p131
      %p133 = scmp.ne.s32.totalorder %s121, %s122
      %p134 = scmp.eq.s32.totalorder %s28, 1
      %p135 = por %p133, %p134
      %p137 = scmp.ne.s32.totalorder %s122, %s136
      %p138 = scmp.eq.s32.totalorder %s28, 0
      %p139 = por %p137, %p138
      %s141 = sadd.s32 %s140, 1
      %p144 = scmp.eq.s32.totalorder %s22, 1
      %p145 = scmp.ne.s32.totalorder %s140, %s142
      %p146 = scmp.eq.s32.totalorder %s22, 0
      %p147 = por %p145, %p146
      %p148 = scmp.ne.s32.totalorder %s140, %s142
      %p149 = scmp.eq.s32.totalorder %s27, 1
      %p150 = por %p148, %p149
      %p151 = scmp.ne.s32.totalorder %s142, %s143
      %p152 = scmp.eq.s32.totalorder %s27, 0
      %p153 = por %p151, %p152
      %p154 = scmp.ne.s32.totalorder %s142, %s143
      %p155 = scmp.eq.s32.totalorder %s28, 1
      %p156 = por %p154, %p155
      %p158 = scmp.ne.s32.totalorder %s143, %s157
      %p159 = scmp.eq.s32.totalorder %s28, 0
      %p160 = por %p158, %p159
      %s162 = sadd.s32 %s161, 1
      %p165 = scmp.eq.s32.totalorder %s22, 1
      %p166 = scmp.ne.s32.totalorder %s161, %s163
      %p167 = scmp.eq.s32.totalorder %s22, 0
      %p168 = por %p166, %p167
      %p169 = scmp.ne.s32.totalorder %s161, %s163
      %p170 = scmp.eq.s32.totalorder %s27, 1
      %p171 = por %p169, %p170
      %p172 = scmp.ne.s32.totalorder %s163, %s164
      %p173 = scmp.eq.s32.totalorder %s27, 0
      %p174 = por %p172, %p173
      %p175 = scmp.ne.s32.totalorder %s163, %s164
      %p176 = scmp.eq.s32.totalorder %s28, 1
      %p177 = por %p175, %p176
      %p179 = scmp.ne.s32.totalorder %s164, %s178
      %p180 = scmp.eq.s32.totalorder %s28, 0
      %p181 = por %p179, %p180
      %s183 = sadd.s32 %s182, 1
      %p186 = scmp.eq.s32.totalorder %s22, 1
      %p187 = scmp.ne.s32.totalorder %s182, %s184
      %p188 = scmp.eq.s32.totalorder %s22, 0
      %p189 = por %p187, %p188
      %p190 = scmp.ne.s32.totalorder %s182, %s184
      %p191 = scmp.eq.s32.totalorder %s27, 1
      %p192 = por %p190, %p191
      %p193 = scmp.ne.s32.totalorder %s184, %s185
      %p194 = scmp.eq.s32.totalorder %s27, 0
      %p195 = por %p193, %p194
      %p196 = scmp.ne.s32.totalorder %s184, %s185
      %p197 = scmp.eq.s32.totalorder %s28, 1
      %p198 = por %p196, %p197
      %p200 = scmp.ne.s32.totalorder %s185, %s199
      %p201 = scmp.eq.s32.totalorder %s28, 0
      %p202 = por %p200, %p201
      %s204 = sadd.s32 %s203, 1
      %p207 = scmp.eq.s32.totalorder %s22, 1
      %p208 = scmp.ne.s32.totalorder %s203, %s205
      %p209 = scmp.eq.s32.totalorder %s22, 0
      %p210 = por %p208, %p209
      %p211 = scmp.ne.s32.totalorder %s203, %s205
      %p212 = scmp.eq.s32.totalorder %s27, 1
      %p213 = por %p211, %p212
      %p214 = scmp.ne.s32.totalorder %s205, %s206
      %p215 = scmp.eq.s32.totalorder %s27, 0
      %p216 = por %p214, %p215
      %p217 = scmp.ne.s32.totalorder %s205, %s206
      %p218 = scmp.eq.s32.totalorder %s28, 1
      %p219 = por %p217, %p218
      %p221 = scmp.ne.s32.totalorder %s206, %s220
      %p222 = scmp.eq.s32.totalorder %s28, 0
      %p223 = por %p221, %p222
      %s225 = sadd.s32 %s224, 1
      %p228 = scmp.eq.s32.totalorder %s22, 1
      %p229 = scmp.ne.s32.totalorder %s224, %s226
      %p230 = scmp.eq.s32.totalorder %s22, 0
      %p231 = por %p229, %p230
      %p232 = scmp.ne.s32.totalorder %s224, %s226
      %p233 = scmp.eq.s32.totalorder %s27, 1
      %p234 = por %p232, %p233
      %p235 = scmp.ne.s32.totalorder %s226, %s227
      %p236 = scmp.eq.s32.totalorder %s27, 0
      %p237 = por %p235, %p236
      %p238 = scmp.ne.s32.totalorder %s226, %s227
      %p239 = scmp.eq.s32.totalorder %s28, 1
      %p240 = por %p238, %p239
      %p242 = scmp.ne.s32.totalorder %s227, %s241
      %p243 = scmp.eq.s32.totalorder %s28, 0
      %p244 = por %p242, %p243
      %s246 = sadd.s32 %s245, 1
      %p249 = scmp.eq.s32.totalorder %s22, 1
      %p250 = scmp.ne.s32.totalorder %s245, %s247
      %p251 = scmp.eq.s32.totalorder %s22, 0
      %p252 = por %p250, %p251
      %p253 = scmp.ne.s32.totalorder %s245, %s247
      %p254 = scmp.eq.s32.totalorder %s27, 1
      %p255 = por %p253, %p254
      %p256 = scmp.ne.s32.totalorder %s247, %s248
      %p257 = scmp.eq.s32.totalorder %s27, 0
      %p258 = por %p256, %p257
      %p259 = scmp.ne.s32.totalorder %s247, %s248
      %p260 = scmp.eq.s32.totalorder %s28, 1
      %p261 = por %p259, %p260
      %p263 = scmp.ne.s32.totalorder %s248, %s262
      %p264 = scmp.eq.s32.totalorder %s28, 0
      %p265 = por %p263, %p264
      %s267 = sadd.s32 %s266, 1
      %p270 = scmp.eq.s32.totalorder %s22, 1
      %p271 = scmp.ne.s32.totalorder %s266, %s268
      %p272 = scmp.eq.s32.totalorder %s22, 0
      %p273 = por %p271, %p272
      %p274 = scmp.ne.s32.totalorder %s266, %s268
      %p275 = scmp.eq.s32.totalorder %s27, 1
      %p276 = por %p274, %p275
      %p277 = scmp.ne.s32.totalorder %s268, %s269
      %p278 = scmp.eq.s32.totalorder %s27, 0
      %p279 = por %p277, %p278
      %p280 = scmp.ne.s32.totalorder %s268, %s269
      %p281 = scmp.eq.s32.totalorder %s28, 1
      %p282 = por %p280, %p281
      %p284 = scmp.ne.s32.totalorder %s269, %s283
      %p285 = scmp.eq.s32.totalorder %s28, 0
      %p286 = por %p284, %p285
      %s288 = sadd.s32 %s287, 1
      %p291 = scmp.eq.s32.totalorder %s22, 1
      %p292 = scmp.ne.s32.totalorder %s287, %s289
      %p293 = scmp.eq.s32.totalorder %s22, 0
      %p294 = por %p292, %p293
      %p295 = scmp.ne.s32.totalorder %s287, %s289
      %p296 = scmp.eq.s32.totalorder %s27, 1
      %p297 = por %p295, %p296
      %p298 = scmp.ne.s32.totalorder %s289, %s290
      %p299 = scmp.eq.s32.totalorder %s27, 0
      %p300 = por %p298, %p299
      %p301 = scmp.ne.s32.totalorder %s289, %s290
      %p302 = scmp.eq.s32.totalorder %s28, 1
      %p303 = por %p301, %p302
      %p305 = scmp.ne.s32.totalorder %s290, %s304
      %p306 = scmp.eq.s32.totalorder %s28, 0
      %p307 = por %p305, %p306
      %s308 = ssub.s32 %s22, %s29
      %p309 = scmp.eq.s32.totalorder %s308, 0
      %s311 = sadd.s32 %s310, 1
      %s312 = scalar_select %p309, %s310, %s311
      %p315 = pneg %p309
      %p316 = scmp.eq.s32.totalorder %s22, 1
      %p317 = por %p315, %p316
      %p318 = scmp.ne.s32.totalorder %s310, %s313
      %p319 = scmp.eq.s32.totalorder %s22, 0
      %p320 = por %p318, %p319
      %p321 = scmp.ne.s32.totalorder %s310, %s313
      %p322 = scmp.eq.s32.totalorder %s27, 1
      %p323 = por %p321, %p322
      %p324 = scmp.ne.s32.totalorder %s313, %s314
      %p325 = scmp.eq.s32.totalorder %s27, 0
      %p326 = por %p324, %p325
      %p327 = scmp.ne.s32.totalorder %s313, %s314
      %p328 = scmp.eq.s32.totalorder %s28, 1
      %p329 = por %p327, %p328
      %p331 = scmp.ne.s32.totalorder %s314, %s330
      %p332 = scmp.eq.s32.totalorder %s28, 0
      %p333 = por %p331, %p332
      %p334 = scmp.le.s32.totalorder 1, %s22
      %p335 = scmp.lt.s32.totalorder %s22, 3
      %p336 = pnand %p334, %p335
      %p337 = pneg %p336
      // Predicated region
      $region9: #{tpu_custom_call.1} parent=5 // pred_check
        _
      $region10: #{tpu_custom_call.1} parent=5 // pred_check_branch
        %339 = sbr.rel (%p336) target = $region12
      $region11: #{tpu_custom_call.1} parent=5 // pred_region
        %s340 = ssub.s32 %s22, 1
        // Predicated region
        $region13: #{tpu_custom_call.1} parent=11 // pred_check
          %p341 = pneg %p69
        $region14: #{tpu_custom_call.1} parent=11 // pred_check_branch
          %343 = sbr.rel (%p341) target = $region16
        $region15: #{tpu_custom_call.1} parent=11 // pred_region
          _
        $region16: #{tpu_custom_call.1} parent=11 // pred_fallthru
          _
        // Predicated region
        $region17: #{tpu_custom_call.1} parent=11 // pred_check
          %p344 = pneg %p90
        $region18: #{tpu_custom_call.1} parent=11 // pred_check_branch
          %346 = sbr.rel (%p344) target = $region20
        $region19: #{tpu_custom_call.1} parent=11 // pred_region
          _
        $region20: #{tpu_custom_call.1} parent=11 // pred_fallthru
          _
        // Predicated region
        $region21: #{tpu_custom_call.1} parent=11 // pred_check
          %p347 = pneg %p111
        $region22: #{tpu_custom_call.1} parent=11 // pred_check_branch
          %349 = sbr.rel (%p347) target = $region24
        $region23: #{tpu_custom_call.1} parent=11 // pred_region
          _
        $region24: #{tpu_custom_call.1} parent=11 // pred_fallthru
          _
        // Predicated region
        $region25: #{tpu_custom_call.1} parent=11 // pred_check
          %p350 = pneg %p132
        $region26: #{tpu_custom_call.1} parent=11 // pred_check_branch
          %352 = sbr.rel (%p350) target = $region28
        $region27: #{tpu_custom_call.1} parent=11 // pred_region
          _
        $region28: #{tpu_custom_call.1} parent=11 // pred_fallthru
          _
        // Predicated region
        $region29: #{tpu_custom_call.1} parent=11 // pred_check
          %p353 = pneg %p153
        $region30: #{tpu_custom_call.1} parent=11 // pred_check_branch
          %355 = sbr.rel (%p353) target = $region32
        $region31: #{tpu_custom_call.1} parent=11 // pred_region
          _
        $region32: #{tpu_custom_call.1} parent=11 // pred_fallthru
          _
        // Predicated region
        $region33: #{tpu_custom_call.1} parent=11 // pred_check
          %p356 = pneg %p174
        $region34: #{tpu_custom_call.1} parent=11 // pred_check_branch
          %358 = sbr.rel (%p356) target = $region36
        $region35: #{tpu_custom_call.1} parent=11 // pred_region
          _
        $region36: #{tpu_custom_call.1} parent=11 // pred_fallthru
          _
        // Predicated region
        $region37: #{tpu_custom_call.1} parent=11 // pred_check
          %p359 = pneg %p195
        $region38: #{tpu_custom_call.1} parent=11 // pred_check_branch
          %361 = sbr.rel (%p359) target = $region40
        $region39: #{tpu_custom_call.1} parent=11 // pred_region
          _
        $region40: #{tpu_custom_call.1} parent=11 // pred_fallthru
          _
        // Predicated region
        $region41: #{tpu_custom_call.1} parent=11 // pred_check
          %p362 = pneg %p216
        $region42: #{tpu_custom_call.1} parent=11 // pred_check_branch
          %364 = sbr.rel (%p362) target = $region44
        $region43: #{tpu_custom_call.1} parent=11 // pred_region
          _
        $region44: #{tpu_custom_call.1} parent=11 // pred_fallthru
          _
        // Predicated region
        $region45: #{tpu_custom_call.1} parent=11 // pred_check
          %p365 = pneg %p237
        $region46: #{tpu_custom_call.1} parent=11 // pred_check_branch
          %367 = sbr.rel (%p365) target = $region48
        $region47: #{tpu_custom_call.1} parent=11 // pred_region
          _
        $region48: #{tpu_custom_call.1} parent=11 // pred_fallthru
          _
        // Predicated region
        $region49: #{tpu_custom_call.1} parent=11 // pred_check
          %p368 = pneg %p258
        $region50: #{tpu_custom_call.1} parent=11 // pred_check_branch
          %370 = sbr.rel (%p368) target = $region52
        $region51: #{tpu_custom_call.1} parent=11 // pred_region
          _
        $region52: #{tpu_custom_call.1} parent=11 // pred_fallthru
          _
        // Predicated region
        $region53: #{tpu_custom_call.1} parent=11 // pred_check
          %p371 = pneg %p279
        $region54: #{tpu_custom_call.1} parent=11 // pred_check_branch
          %373 = sbr.rel (%p371) target = $region56
        $region55: #{tpu_custom_call.1} parent=11 // pred_region
          _
        $region56: #{tpu_custom_call.1} parent=11 // pred_fallthru
          _
        // Predicated region
        $region57: #{tpu_custom_call.1} parent=11 // pred_check
          %p374 = pneg %p300
        $region58: #{tpu_custom_call.1} parent=11 // pred_check_branch
          %376 = sbr.rel (%p374) target = $region60
        $region59: #{tpu_custom_call.1} parent=11 // pred_region
          _
        $region60: #{tpu_custom_call.1} parent=11 // pred_fallthru
          _
      $region12: #{tpu_custom_call.1} parent=5 // pred_fallthru
        _
      %p377 = scmp.lt.s32.totalorder %s22, 2
      // Predicated region
      $region61: #{tpu_custom_call.1} parent=5 // pred_check
        %p378 = pneg %p377
      $region62: #{tpu_custom_call.1} parent=5 // pred_check_branch
        %380 = sbr.rel (%p378) target = $region64
      $region63: #{tpu_custom_call.1} parent=5 // pred_region
        // Predicated region
        $region65: #{tpu_custom_call.1} parent=63 // pred_check
          %p381 = pneg %p42
        $region66: #{tpu_custom_call.1} parent=63 // pred_check_branch
          %383 = sbr.rel (%p381) target = $region68
        $region67: #{tpu_custom_call.1} parent=63 // pred_region
          %p384 = scmp.lt.s32.totalorder %s22, 1
          %s385 = scalar_select %p384, %s22, 1
          %s386 = smul.addr %s385, 8
          %s387 = scalar_lea.vmem %s0, %s386
        $region68: #{tpu_custom_call.1} parent=63 // pred_fallthru
          _
      $region64: #{tpu_custom_call.1} parent=5 // pred_fallthru
        _
      %p388 = scmp.le.s32.totalorder 1, %s22
      %p389 = scmp.lt.s32.totalorder %s22, 3
      %p390 = pnand %p388, %p389
      %p391 = pneg %p390
      // Predicated region
      $region69: #{tpu_custom_call.1} parent=5 // pred_check
        _
      $region70: #{tpu_custom_call.1} parent=5 // pred_check_branch
        %393 = sbr.rel (%p390) target = $region72
      $region71: #{tpu_custom_call.1} parent=5 // pred_region
        %s394 = ssub.s32 %s22, 1
        %p395 = scmp.lt.s32.totalorder %s27, 1
        %s396 = scalar_select %p395, %s27, 1
        %s397 = smul.addr %s396, 8
        %s398 = scalar_lea.vmem %s0, %s397
        %p399 = pneg %p48
        %p400 = pneg %p45
        %p401 = pneg %p69
        %p402 = pneg %p66
        %p403 = pneg %p90
        %p404 = pneg %p87
        %p405 = pneg %p111
        %p406 = pneg %p108
        %p407 = pneg %p132
        %p408 = pneg %p129
        %p409 = pneg %p153
        %p410 = pneg %p150
        %p411 = pneg %p174
        %p412 = pneg %p171
        %p413 = pneg %p195
        %p414 = pneg %p192
        %p415 = pneg %p216
        %p416 = pneg %p213
        %p417 = pneg %p237
        %p418 = pneg %p234
        %p419 = pneg %p258
        %p420 = pneg %p255
        %p421 = pneg %p279
        %p422 = pneg %p276
        %p423 = pneg %p300
        %p424 = pneg %p297
        %p425 = pneg %p326
        %p426 = pneg %p323
        %s427 = sand.u32 %s313, 1
        %s428 = scalar_lea.sflag [#allocation4], %s427
        %s429 = sand.u32 %s313, 1
        %s430 = smul.addr %s429, 8
        %s431 = scalar_lea.vmem [#allocation3], %s430
        %p432 = scmp.lt.s32.totalorder %s27, 1
        %s433 = scalar_select %p432, %s27, 1
        %s434 = smul.addr %s433, 8
        %s435 = scalar_lea.vmem %s0, %s434
        %v437 = vld [vmem:[%s435] sm:$0xff]
        %v438 = vld [vmem:[%s1] sm:$0x1]
        %v439 = vld [vmem:[%s2] sm:$0x1]
        %vm440 = vcmask 261120
        %v441 = vsel %vm440, %v437, 0.0
        %442 = vadd.xlane.f32.xlu0 %v441
        %v443 = vpop.xlane.xlu0 %442
        %v444 = vrcp.pop 32.0
        %v445 = vmul.f32 32.0, %v444
        %v446 = vsub.f32 1.0, %v445
        %v447 = vmul.f32 %v444, %v446
        %v448 = vadd.f32 %v444, %v447
        %vm449 = vweird.f32 %v444
        %v450 = vsel %vm449, %v444, %v448
        %v451 = vmul.f32 %v443, %v450
        %v452 = vsub.f32 %v437, %v451
        %v453 = vmul.f32 %v452, %v452
        %v454 = vsel %vm440, %v453, 0.0
        %455 = vadd.xlane.f32.xlu0 %v454
        %v456 = vpop.xlane.xlu0 %455
        %v457 = vmul.f32 %v456, %v450
        %v458 = vadd.f32 %v457, 1e-05
        %v459 = vrsqrt.pop %v458
        %v460 = vmul.f32 %v459, %v458
        %v461 = vmul.f32 %v460, %v459
        %v462 = vmul.f32 0.5, %v461
        %v463 = vsub.f32 1.5, %v462
        %v464 = vmul.f32 %v459, %v463
        %vm465 = vweird.f32 %v458
        %vm466 = vweird.f32 %v459
        %vm467 = vmor %vm465, %vm466
        %v468 = vsel %vm467, %v459, %v464
        %v469 = vmul.f32 %v452, %v468
        %v471 = vperm.slane %v438, 0
        %v473 = vmul.f32 %v469, %v471
        %v475 = vperm.slane %v439, 0
        %v477 = vadd.f32 %v473, %v475
        %v478 = vpack.c.bf16 %v477, %v477
        %v479 = vld [vmem:[%s3] sm:$0xf]
        %v480 = vld [vmem:[%s3 + $0x4] sm:$0xf]
        %v481 = vld [vmem:[%s3 + $0x8] sm:$0xf]
        %v482 = vld [vmem:[%s3 + $0xc] sm:$0xf]
        %v483 = vld [vmem:[%s4] sm:$0x1]
        %v485 = vperm.slane %v483, 0
        %v491 = vunpack.c.l.b16 %v479
        %v492 = vunpack.c.l.b16 %v480
        %v493 = vunpack.c.l.b16 %v481
        %v494 = vunpack.c.l.b16 %v482
        %v495 = vpack.c.b16 %v492, %v491
        %v496 = vpack.c.b16 %v494, %v493
        %v500 = vsel %vm440, %v478, 0
        %502 = vmatpush.bf16.msra.mxu0 0
        %503 = vmatpush.bf16.msra.mxu0 0
        %504 = vmatpush.bf16.msra.mxu0 0
        %505 = vmatpush.bf16.msra.mxu0 0
        %506 = vmatpush.bf16.msra.mxu0 0
        %507 = vmatpush.bf16.msra.mxu0 0
        %508 = vmatpush.bf16.msra.mxu0 %v496
        %509 = vmatpush.bf16.msra.mxu0 %v495
        %510 = vmatmul.bf16.gmra.mxu0 %v500
        %v511 = vpop.f32.mrf.mxu0
        %v512 = vadd.f32 %v485, %v511
        %v513 = vpop.f32.mrf.mxu0
        %514 = vdwg.mxu0
        %v515 = vmul.f32 %v512, 0.35355338
        %v516 = vpack.c.bf16 %v515, %v515
        %v517 = vpack.c.bf16 %v512, %v512
        %519 = vrot.lane.b32.xlu0 %v517, 96
        %v520 = vpop.permute.xlu0 %519
        %vm521 = vcmask 64512
        %v523 = vsel %vm521, %v516, 0
        %v526 = vsel %vm521, %v520, 0
        %528 = vmatpush.bf16.xpose.msra.mxu0 0
        %529 = vmatpush.bf16.xpose.msra.mxu0 0
        %530 = vmatpush.bf16.xpose.msra.mxu0 0
        %531 = vmatpush.bf16.xpose.msra.mxu0 0
        %532 = vmatpush.bf16.xpose.msra.mxu0 0
        %533 = vmatpush.bf16.xpose.msra.mxu0 0
        %534 = vmatpush.bf16.xpose.msra.mxu0 0
        %535 = vmatpush.bf16.xpose.msra.mxu0 %v526
        %536 = vmatmul.bf16.gmra.mxu0 %v523
        %v537 = vpop.f32.mrf.mxu0
        %v538 = vadd.f32 0.0, %v537
        %v539 = vpop.f32.mrf.mxu0
        %540 = vdwg.mxu0
        %v541 = vsel %vm521, %v538, -inf
        %542 = vmax.xlane.f32.xlu0 %v541
        %v543 = vpop.xlane.xlu0 %542
        %v544 = vsub.f32 %v538, %v543
        %v545 = vmul.f32 %v544, 1.442695
        %v546 = vpow.pop %v545
        %v547 = vsel %vm521, %v546, 0.0
        %548 = vadd.xlane.f32.xlu0 %v547
        %v549 = vpop.xlane.xlu0 %548
        %v550 = vrcp.pop %v549
        %v551 = vmul.f32 %v546, %v550
        %v552 = vpack.c.bf16 %v551, %v551
        %553 = vrot.lane.b32.xlu0 %v517, 64
        %v554 = vpop.permute.xlu0 %553
        %v556 = vsel %vm521, %v552, 0
        %vm558 = vcmask 1043456
        %v560 = vsel %vm558, %v554, 0
        %562 = vmatpush.bf16.msra.mxu0 0
        %563 = vmatpush.bf16.msra.mxu0 0
        %564 = vmatpush.bf16.msra.mxu0 0
        %565 = vmatpush.bf16.msra.mxu0 0
        %566 = vmatpush.bf16.msra.mxu0 0
        %567 = vmatpush.bf16.msra.mxu0 0
        %568 = vmatpush.bf16.msra.mxu0 0
        %569 = vmatpush.bf16.msra.mxu0 %v560
        %570 = vmatmul.bf16.gmra.mxu0 %v556
        %v571 = vpop.f32.mrf.mxu0
        %v572 = vadd.f32 0.0, %v571
        %v573 = vpop.f32.mrf.mxu0
        %574 = vdwg.mxu0
        %575 = vst.msk [vmem:[#allocation2] sm:$0xff] %vm521, %v572
        %577 = vrot.lane.b32.xlu0 %v516, 120
        %v578 = vpop.permute.xlu0 %577
        %579 = vrot.lane.b32.xlu0 %v517, 88
        %v580 = vpop.permute.xlu0 %579
        %v582 = vsel %vm521, %v578, 0
        %v585 = vsel %vm521, %v580, 0
        %587 = vmatpush.bf16.xpose.msra.mxu0 0
        %588 = vmatpush.bf16.xpose.msra.mxu0 0
        %589 = vmatpush.bf16.xpose.msra.mxu0 0
        %590 = vmatpush.bf16.xpose.msra.mxu0 0
        %591 = vmatpush.bf16.xpose.msra.mxu0 0
        %592 = vmatpush.bf16.xpose.msra.mxu0 0
        %593 = vmatpush.bf16.xpose.msra.mxu0 0
        %594 = vmatpush.bf16.xpose.msra.mxu0 %v585
        %595 = vmatmul.bf16.gmra.mxu0 %v582
        %v596 = vpop.f32.mrf.mxu0
        %v597 = vadd.f32 0.0, %v596
        %v598 = vpop.f32.mrf.mxu0
        %599 = vdwg.mxu0
        %v600 = vsel %vm521, %v597, -inf
        %601 = vmax.xlane.f32.xlu0 %v600
        %v602 = vpop.xlane.xlu0 %601
        %v603 = vsub.f32 %v597, %v602
        %v604 = vmul.f32 %v603, 1.442695
        %v605 = vpow.pop %v604
        %v606 = vsel %vm521, %v605, 0.0
        %607 = vadd.xlane.f32.xlu0 %v606
        %v608 = vpop.xlane.xlu0 %607
        %v609 = vrcp.pop %v608
        %v610 = vmul.f32 %v605, %v609
        %v611 = vpack.c.bf16 %v610, %v610
        %612 = vrot.lane.b32.xlu0 %v517, 56
        %v613 = vpop.permute.xlu0 %612
        %v615 = vsel %vm521, %v611, 0
        %v618 = vsel %vm558, %v613, 0
        %620 = vmatpush.bf16.msra.mxu0 0
        %621 = vmatpush.bf16.msra.mxu0 0
        %622 = vmatpush.bf16.msra.mxu0 0
        %623 = vmatpush.bf16.msra.mxu0 0
        %624 = vmatpush.bf16.msra.mxu0 0
        %625 = vmatpush.bf16.msra.mxu0 0
        %626 = vmatpush.bf16.msra.mxu0 0
        %627 = vmatpush.bf16.msra.mxu0 %v618
        %628 = vmatmul.bf16.gmra.mxu0 %v615
        %v629 = vpop.f32.mrf.mxu0
        %v630 = vadd.f32 0.0, %v629
        %v631 = vpop.f32.mrf.mxu0
        %632 = vdwg.mxu0
        %634 = vrot.lane.b32.xlu0 %v630, 8
        %v635 = vpop.permute.xlu0 %634
        %vm637 = vcmask 130112
        %638 = vst.msk [vmem:[#allocation2] sm:$0xff] %vm637, %v635
        %639 = vrot.lane.b32.xlu0 %v516, 112
        %v640 = vpop.permute.xlu0 %639
        %641 = vrot.lane.b32.xlu0 %v517, 80
        %v642 = vpop.permute.xlu0 %641
        %v644 = vsel %vm521, %v640, 0
        %v647 = vsel %vm521, %v642, 0
        %649 = vmatpush.bf16.xpose.msra.mxu0 0
        %650 = vmatpush.bf16.xpose.msra.mxu0 0
        %651 = vmatpush.bf16.xpose.msra.mxu0 0
        %652 = vmatpush.bf16.xpose.msra.mxu0 0
        %653 = vmatpush.bf16.xpose.msra.mxu0 0
        %654 = vmatpush.bf16.xpose.msra.mxu0 0
        %655 = vmatpush.bf16.xpose.msra.mxu0 0
        %656 = vmatpush.bf16.xpose.msra.mxu0 %v647
        %657 = vmatmul.bf16.gmra.mxu0 %v644
        %v658 = vpop.f32.mrf.mxu0
        %v659 = vadd.f32 0.0, %v658
        %v660 = vpop.f32.mrf.mxu0
        %661 = vdwg.mxu0
        %v662 = vsel %vm521, %v659, -inf
        %663 = vmax.xlane.f32.xlu0 %v662
        %v664 = vpop.xlane.xlu0 %663
        %v665 = vsub.f32 %v659, %v664
        %v666 = vmul.f32 %v665, 1.442695
        %v667 = vpow.pop %v666
        %v668 = vsel %vm521, %v667, 0.0
        %669 = vadd.xlane.f32.xlu0 %v668
        %v670 = vpop.xlane.xlu0 %669
        %v671 = vrcp.pop %v670
        %v672 = vmul.f32 %v667, %v671
        %v673 = vpack.c.bf16 %v672, %v672
        %674 = vrot.lane.b32.xlu0 %v517, 48
        %v675 = vpop.permute.xlu0 %674
        %v677 = vsel %vm521, %v673, 0
        %v680 = vsel %vm558, %v675, 0
        %682 = vmatpush.bf16.msra.mxu0 0
        %683 = vmatpush.bf16.msra.mxu0 0
        %684 = vmatpush.bf16.msra.mxu0 0
        %685 = vmatpush.bf16.msra.mxu0 0
        %686 = vmatpush.bf16.msra.mxu0 0
        %687 = vmatpush.bf16.msra.mxu0 0
        %688 = vmatpush.bf16.msra.mxu0 0
        %689 = vmatpush.bf16.msra.mxu0 %v680
        %690 = vmatmul.bf16.gmra.mxu0 %v677
        %v691 = vpop.f32.mrf.mxu0
        %v692 = vadd.f32 0.0, %v691
        %v693 = vpop.f32.mrf.mxu0
        %694 = vdwg.mxu0
        %696 = vrot.lane.b32.xlu0 %v692, 16
        %v697 = vpop.permute.xlu0 %696
        %vm699 = vcmask 195712
        %700 = vst.msk [vmem:[#allocation2] sm:$0xff] %vm699, %v697
        %701 = vrot.lane.b32.xlu0 %v516, 104
        %v702 = vpop.permute.xlu0 %701
        %703 = vrot.lane.b32.xlu0 %v517, 72
        %v704 = vpop.permute.xlu0 %703
        %v706 = vsel %vm521, %v702, 0
        %v709 = vsel %vm521, %v704, 0
        %711 = vmatpush.bf16.xpose.msra.mxu0 0
        %712 = vmatpush.bf16.xpose.msra.mxu0 0
        %713 = vmatpush.bf16.xpose.msra.mxu0 0
        %714 = vmatpush.bf16.xpose.msra.mxu0 0
        %715 = vmatpush.bf16.xpose.msra.mxu0 0
        %716 = vmatpush.bf16.xpose.msra.mxu0 0
        %717 = vmatpush.bf16.xpose.msra.mxu0 0
        %718 = vmatpush.bf16.xpose.msra.mxu0 %v709
        %719 = vmatmul.bf16.gmra.mxu0 %v706
        %v720 = vpop.f32.mrf.mxu0
        %v721 = vadd.f32 0.0, %v720
        %v722 = vpop.f32.mrf.mxu0
        %723 = vdwg.mxu0
        %v724 = vsel %vm521, %v721, -inf
        %725 = vmax.xlane.f32.xlu0 %v724
        %v726 = vpop.xlane.xlu0 %725
        %v727 = vsub.f32 %v721, %v726
        %v728 = vmul.f32 %v727, 1.442695
        %v729 = vpow.pop %v728
        %v730 = vsel %vm521, %v729, 0.0
        %731 = vadd.xlane.f32.xlu0 %v730
        %v732 = vpop.xlane.xlu0 %731
        %v733 = vrcp.pop %v732
        %v734 = vmul.f32 %v729, %v733
        %v735 = vpack.c.bf16 %v734, %v734
        %736 = vrot.lane.b32.xlu0 %v517, 40
        %v737 = vpop.permute.xlu0 %736
        %v739 = vsel %vm521, %v735, 0
        %v742 = vsel %vm558, %v737, 0
        %744 = vmatpush.bf16.msra.mxu0 0
        %745 = vmatpush.bf16.msra.mxu0 0
        %746 = vmatpush.bf16.msra.mxu0 0
        %747 = vmatpush.bf16.msra.mxu0 0
        %748 = vmatpush.bf16.msra.mxu0 0
        %749 = vmatpush.bf16.msra.mxu0 0
        %750 = vmatpush.bf16.msra.mxu0 0
        %751 = vmatpush.bf16.msra.mxu0 %v742
        %752 = vmatmul.bf16.gmra.mxu0 %v739
        %v753 = vpop.f32.mrf.mxu0
        %v754 = vadd.f32 0.0, %v753
        %v755 = vpop.f32.mrf.mxu0
        %756 = vdwg.mxu0
        %758 = vrot.lane.b32.xlu0 %v754, 24
        %v759 = vpop.permute.xlu0 %758
        %vm761 = vcmask 261312
        %762 = vst.msk [vmem:[#allocation2] sm:$0xff] %vm761, %v759
        %v763 = vld [vmem:[#allocation2] sm:$0xff]
        %v764 = vpack.c.bf16 %v763, %v763
        %v765 = vld [vmem:[%s5] sm:$0xf]
        %v766 = vld [vmem:[%s5 + $0x4] sm:$0xf]
        %v767 = vld [vmem:[%s5 + $0x8] sm:$0xf]
        %v768 = vld [vmem:[%s5 + $0xc] sm:$0xf]
        %v769 = vld [vmem:[%s6] sm:$0x1]
        %v771 = vperm.slane %v769, 0
        %v777 = vunpack.c.l.b16 %v765
        %v778 = vunpack.c.l.b16 %v766
        %v779 = vunpack.c.l.b16 %v767
        %v780 = vunpack.c.l.b16 %v768
        %v781 = vpack.c.b16 %v778, %v777
        %v782 = vpack.c.b16 %v780, %v779
        %v786 = vsel %vm440, %v764, 0
        %788 = vmatpush.bf16.msra.mxu0 0
        %789 = vmatpush.bf16.msra.mxu0 0
        %790 = vmatpush.bf16.msra.mxu0 0
        %791 = vmatpush.bf16.msra.mxu0 0
        %792 = vmatpush.bf16.msra.mxu0 0
        %793 = vmatpush.bf16.msra.mxu0 0
        %794 = vmatpush.bf16.msra.mxu0 %v782
        %795 = vmatpush.bf16.msra.mxu0 %v781
        %796 = vmatmul.bf16.gmra.mxu0 %v786
        %v797 = vpop.f32.mrf.mxu0
        %v798 = vadd.f32 %v771, %v797
        %v799 = vpop.f32.mrf.mxu0
        %800 = vdwg.mxu0
        %v801 = vadd.f32 %v437, %v798
        %v802 = vld [vmem:[%s7] sm:$0x1]
        %v803 = vld [vmem:[%s8] sm:$0x1]
        %v804 = vsel %vm440, %v801, 0.0
        %805 = vadd.xlane.f32.xlu0 %v804
        %v806 = vpop.xlane.xlu0 %805
        %v807 = vmul.f32 %v806, %v450
        %v808 = vsub.f32 %v801, %v807
        %v809 = vmul.f32 %v808, %v808
        %v810 = vsel %vm440, %v809, 0.0
        %811 = vadd.xlane.f32.xlu0 %v810
        %v812 = vpop.xlane.xlu0 %811
        %v813 = vmul.f32 %v812, %v450
        %v814 = vadd.f32 %v813, 1e-05
        %v815 = vrsqrt.pop %v814
        %v816 = vmul.f32 %v815, %v814
        %v817 = vmul.f32 %v816, %v815
        %v818 = vmul.f32 0.5, %v817
        %v819 = vsub.f32 1.5, %v818
        %v820 = vmul.f32 %v815, %v819
        %vm821 = vweird.f32 %v814
        %vm822 = vweird.f32 %v815
        %vm823 = vmor %vm821, %vm822
        %v824 = vsel %vm823, %v815, %v820
        %v825 = vmul.f32 %v808, %v824
        %v827 = vperm.slane %v802, 0
        %v829 = vmul.f32 %v825, %v827
        %v831 = vperm.slane %v803, 0
        %v833 = vadd.f32 %v829, %v831
        %v834 = vpack.c.bf16 %v833, %v833
        %v835 = vld [vmem:[%s9] sm:$0xf]
        %v836 = vld [vmem:[%s9 + $0x4] sm:$0xf]
        %v837 = vld [vmem:[%s9 + $0x8] sm:$0xf]
        %v838 = vld [vmem:[%s9 + $0xc] sm:$0xf]
        %v839 = vld [vmem:[%s10] sm:$0x1]
        %v841 = vperm.slane %v839, 0
        %v847 = vunpack.c.l.b16 %v835
        %v848 = vunpack.c.l.b16 %v836
        %v849 = vunpack.c.l.b16 %v837
        %v850 = vunpack.c.l.b16 %v838
        %v851 = vpack.c.b16 %v848, %v847
        %v852 = vpack.c.b16 %v850, %v849
        %v856 = vsel %vm440, %v834, 0
        %858 = vmatpush.bf16.msra.mxu0 0
        %859 = vmatpush.bf16.msra.mxu0 0
        %860 = vmatpush.bf16.msra.mxu0 0
        %861 = vmatpush.bf16.msra.mxu0 0
        %862 = vmatpush.bf16.msra.mxu0 0
        %863 = vmatpush.bf16.msra.mxu0 0
        %864 = vmatpush.bf16.msra.mxu0 %v852
        %865 = vmatpush.bf16.msra.mxu0 %v851
        %866 = vmatmul.bf16.gmra.mxu0 %v856
        %v867 = vpop.f32.mrf.mxu0
        %v868 = vadd.f32 %v841, %v867
        %v869 = vpop.f32.mrf.mxu0
        %870 = vdwg.mxu0
        %v871 = vmul.f32 %v868, 0.5
        %v872 = vmul.f32 %v868, 0.70710677
        %v873 = vand.u32 2147483647, %v872
        %v874 = vmul.f32 %v873, 0.3275911
        %v875 = vadd.f32 %v874, 1.0
        %v876 = vrcp.pop %v875
        %v877 = vmul.f32 %v875, %v876
        %v878 = vsub.f32 1.0, %v877
        %v879 = vmul.f32 %v876, %v878
        %v880 = vadd.f32 %v876, %v879
        %vm881 = vweird.f32 %v875
        %vm882 = vweird.f32 %v876
        %vm883 = vmor %vm881, %vm882
        %v884 = vsel %vm883, %v876, %v880
        %v885 = vand.u32 2147483647, %v875
        %vm886 = vcmp.eq.f32.partialorder %v885, 8.507059e+37
        %v887 = vand.u32 %v875, 2147483648
        %v888 = vor.u32 1.1754944e-38, %v887
        %v889 = vsel %vm886, %v888, %v884
        %v890 = vmul.f32 1.0, %v889
        %v891 = vmul.f32 %v890, 1.0614054
        %v892 = vadd.f32 %v891, -1.4531521
        %v893 = vmul.f32 %v892, %v890
        %v894 = vadd.f32 %v893, 1.4214138
        %v895 = vmul.f32 %v894, %v890
        %v896 = vadd.f32 %v895, -0.28449672
        %v897 = vmul.f32 %v896, %v890
        %v898 = vadd.f32 %v897, 0.2548296
        %v899 = vmul.f32 %v898, %v890
        %v900 = vsub.f32 0.0, %v873
        %v901 = vmul.f32 %v900, %v873
        %v902 = vmul.f32 %v901, 1.442695
        %v903 = vpow.pop %v902
        %v904 = vmul.f32 %v899, %v903
        %v905 = vsub.f32 1.0, %v904
        %vm906 = vcmp.lt.f32.partialorder %v872, 0.0
        %v907 = vsub.f32 0.0, %v905
        %v908 = vsel %vm906, %v907, %v905
        %v909 = vadd.f32 %v908, 1.0
        %v910 = vmul.f32 %v871, %v909
        %v911 = vpack.c.bf16 %v910, %v910
        %v912 = vld [vmem:[%s11] sm:$0xf]
        %v913 = vld [vmem:[%s11 + $0x4] sm:$0xf]
        %v914 = vld [vmem:[%s11 + $0x8] sm:$0xf]
        %v915 = vld [vmem:[%s11 + $0xc] sm:$0xf]
        %v916 = vld [vmem:[%s11 + $0x10] sm:$0xf]
        %v917 = vld [vmem:[%s11 + $0x14] sm:$0xf]
        %v918 = vld [vmem:[%s11 + $0x18] sm:$0xf]
        %v919 = vld [vmem:[%s11 + $0x1c] sm:$0xf]
        %v920 = vld [vmem:[%s11 + $0x20] sm:$0xf]
        %v921 = vld [vmem:[%s11 + $0x24] sm:$0xf]
        %v922 = vld [vmem:[%s11 + $0x28] sm:$0xf]
        %v923 = vld [vmem:[%s11 + $0x2c] sm:$0xf]
        %v924 = vld [vmem:[%s11 + $0x30] sm:$0xf]
        %v925 = vld [vmem:[%s11 + $0x34] sm:$0xf]
        %v926 = vld [vmem:[%s11 + $0x38] sm:$0xf]
        %v927 = vld [vmem:[%s11 + $0x3c] sm:$0xf]
        %v928 = vld [vmem:[%s12] sm:$0x1]
        %v930 = vperm.slane %v928, 0
        %v948 = vunpack.c.l.b16 %v912
        %v949 = vunpack.c.l.b16 %v913
        %v950 = vunpack.c.l.b16 %v914
        %v951 = vunpack.c.l.b16 %v915
        %v952 = vunpack.c.l.b16 %v916
        %v953 = vunpack.c.l.b16 %v917
        %v954 = vunpack.c.l.b16 %v918
        %v955 = vunpack.c.l.b16 %v919
        %v956 = vunpack.c.l.b16 %v920
        %v957 = vunpack.c.l.b16 %v921
        %v958 = vunpack.c.l.b16 %v922
        %v959 = vunpack.c.l.b16 %v923
        %v960 = vunpack.c.l.b16 %v924
        %v961 = vunpack.c.l.b16 %v925
        %v962 = vunpack.c.l.b16 %v926
        %v963 = vunpack.c.l.b16 %v927
        %v964 = vpack.c.b16 %v949, %v948
        %v965 = vpack.c.b16 %v951, %v950
        %v966 = vpack.c.b16 %v953, %v952
        %v967 = vpack.c.b16 %v955, %v954
        %v968 = vpack.c.b16 %v957, %v956
        %v969 = vpack.c.b16 %v959, %v958
        %v970 = vpack.c.b16 %v961, %v960
        %v971 = vpack.c.b16 %v963, %v962
        %980 = vmatpush.bf16.msra.mxu0 %v971
        %981 = vmatpush.bf16.msra.mxu0 %v970
        %982 = vmatpush.bf16.msra.mxu0 %v969
        %983 = vmatpush.bf16.msra.mxu0 %v968
        %984 = vmatpush.bf16.msra.mxu0 %v967
        %985 = vmatpush.bf16.msra.mxu0 %v966
        %986 = vmatpush.bf16.msra.mxu0 %v965
        %987 = vmatpush.bf16.msra.mxu0 %v964
        %988 = vmatmul.bf16.gmra.mxu0 %v911
        %v989 = vpop.f32.mrf.mxu0
        %v990 = vadd.f32 %v930, %v989
        %v991 = vpop.f32.mrf.mxu0
        %992 = vdwg.mxu0
        %v993 = vadd.f32 %v801, %v990
        %994 = vst.msk [vmem:[%s431] sm:$0xff] %vm440, %v993
        %s995 = sand.u32 %s313, 1
        %s996 = scalar_lea.sflag [#allocation4], %s995
        %s997 = sand.u32 %s313, 1
        %s998 = smul.addr %s997, 8
        %s999 = scalar_lea.vmem [#allocation3], %s998
        // Predicated region
        $region73: #{tpu_custom_call.1} parent=71 // pred_check
          %p1000 = pneg %p323
        $region74: #{tpu_custom_call.1} parent=71 // pred_check_branch
          %1002 = sbr.rel (%p1000) target = $region76
        $region75: #{tpu_custom_call.1} parent=71 // pred_region
          %1004 = vsyncadd %s996, 0
          %s1005 = smul.addr %s27, 8
          %s1006 = scalar_lea.hbm %s13, %s1005
          %s1008 = sshll.u32 %s999, 4
          %s1009 = int_to_ptr.vmem [resolvable:$true] %s1008
          %s1010 = sshll.u32 %s1006, 4
          %s1011 = int_to_ptr.hbm [resolvable:$true] %s1010
          %1013 = dma.vmem_to_hbm [thread:$0]  %s1009, 128, %s1011, %s996
        $region76: #{tpu_custom_call.1} parent=71 // pred_fallthru
          _
      $region72: #{tpu_custom_call.1} parent=5 // pred_fallthru
        _
      %p1014 = scmp.le.s32.totalorder 2, %s22
      // Predicated region
      $region77: #{tpu_custom_call.1} parent=5 // pred_check
        %p1015 = pneg %p1014
      $region78: #{tpu_custom_call.1} parent=5 // pred_check_branch
        %1017 = sbr.rel (%p1015) target = $region80
      $region79: #{tpu_custom_call.1} parent=5 // pred_region
        %s1018 = ssub.s32 %s22, 2
        // Predicated region
        $region81: #{tpu_custom_call.1} parent=79 // pred_check
          %p1019 = pneg %p329
        $region82: #{tpu_custom_call.1} parent=79 // pred_check_branch
          %1021 = sbr.rel (%p1019) target = $region84
        $region83: #{tpu_custom_call.1} parent=79 // pred_region
          %s1022 = sand.u32 %s314, 1
          %s1023 = scalar_lea.sflag [#allocation4], %s1022
          %s1024 = sand.u32 %s314, 1
          %s1025 = smul.addr %s1024, 8
          %s1026 = scalar_lea.vmem [#allocation3], %s1025
          %1028 = dma.done %s1023, 128
        $region84: #{tpu_custom_call.1} parent=79 // pred_fallthru
          _
      $region80: #{tpu_custom_call.1} parent=5 // pred_fallthru
        _
    $region6: #{tpu_custom_call.1} parent=1 // loop_footer
      %s26 = sadd.s32 1, %s22
    $region7: #{tpu_custom_call.1} parent=1 // loop_footer_branch
      %21 = sbr.rel target = $region3
    $region8: #{tpu_custom_call.1} parent=1 // loop_exit
      _
    %1029 = vsyncpa [#allocation4], 1
    %s1030 = scalar_lea.sflag [#allocation4], 1
    %1031 = vsyncpa %s1030, 1

</llo_original>
